<compile_context>
chip_gen: v7x
topology: tpu7x:2x2x1
jax: 0.10.0
libtpu: 0.0.40
codegen_flags: <defaults>
</compile_context>

<pallas_src>
import jax
import jax.numpy as jnp
from jax.experimental import pallas as pl
from jax.experimental.pallas import tpu as pltpu


def _choose_pixel_tile(P, N, budget_bytes=20 * 1024 * 1024):
    """Largest multiple-of-128 divisor of P whose (N, TP) working set fits budget."""
    # ~8 live f32 (N, TP) intermediates dominate VMEM inside the kernel.
    cap = max(128, budget_bytes // (32 * max(int(N), 1)))
    best = None
    tp = 128
    limit = min(P, cap, 4096)
    while tp <= limit:
        if P % tp == 0:
            best = tp
        tp += 128
    if best is None:
        # Fall back to the full pixel grid (block dim == array dim is always legal).
        best = P
    return best


def _make_kernel(N, F, K, TP, r, weight_calculation, compositor, matmul_dtype):
    R2 = float(r) * float(r)
    INV_R2 = 1.0 / R2
    INF = float("inf")  # Python float -> no captured jax-array constants.

    def kernel(ndc_ref, pts_ref, featsT_ref,
               idx_ref, zbuf_ref, dist_ref, w_ref, feat_ref, depth_ref):
        b = pl.program_id(0)

        pts = pts_ref[0]                      # (N, 3)
        px = pts[:, 0:1]                      # (N, 1)
        py = pts[:, 1:2]
        pz = pts[:, 2:3]

        ndc_x = ndc_ref[0:1, :]               # (1, TP)
        ndc_y = ndc_ref[1:2, :]               # (1, TP)

        dx = px - ndc_x                       # (N, TP)
        dy = py - ndc_y
        dist2 = dx * dx + dy * dy             # (N, TP)
        valid0 = (dist2 <= R2) & (pz >= 0.0)  # (N, TP)
        # z_masked encodes both depth and validity: INF == not selectable.
        z_masked0 = jnp.where(valid0, pz, INF)
        n_iota = jax.lax.broadcasted_iota(jnp.int32, (N, TP), 0)

        def body(k, carry):
            z_masked, wsel, cum, wsum, zwsum = carry

            zmin = jnp.min(z_masked, axis=0, keepdims=True)        # (1, TP)
            has = zmin < INF                                       # (1, TP)
            cand = jnp.where((z_masked == zmin) & has, n_iota, N)  # (N, TP)
            sel_n = jnp.min(cand, axis=0, keepdims=True)           # (1, TP)
            sel_mask = n_iota == sel_n                             # (N, TP)

            d_k = jnp.sum(jnp.where(sel_mask, dist2, 0.0), axis=0, keepdims=True)
            d_k = jnp.where(has, d_k, -1.0)                        # (1, TP)
            z_k = jnp.where(has, zmin, -1.0)                       # (1, TP)
            idx_k = jnp.where(has, b * N + sel_n, -1)              # packed idx

            # --- weight calculation ({exponential,linear}_alpha) ---
            dn = d_k * INV_R2
            if weight_calculation == "exponential":
                w_k = jnp.exp(-jnp.maximum(dn, 0.0))
            elif weight_calculation == "linear":
                w_k = 1.0 - dn
            else:
                raise ValueError(weight_calculation)
            w_k = jnp.clip(w_k, 0.0, 0.99)

            alpha_eff = jnp.where(has, w_k, 0.0)                   # skip idx < 0
            if compositor == "alpha":
                coeff = cum * alpha_eff
                cum = cum * (1.0 - alpha_eff)
            elif compositor in ("weighted_sum", "norm_weighted_sum"):
                coeff = alpha_eff
            else:
                raise ValueError(compositor)
            # Accumulate the selection-weight matrix; the gather matmul happens
            # once after the loop: acc = featsT @ wsel.
            wsel = wsel + coeff * sel_mask.astype(jnp.float32)

            # depth accumulators
            wsum = wsum + alpha_eff
            zwsum = zwsum + z_k * alpha_eff

            # direct per-k stores (no Python lists / concatenates)
            idx_ref[0, pl.ds(k, 1), :] = idx_k
            zbuf_ref[0, pl.ds(k, 1), :] = z_k
            dist_ref[0, pl.ds(k, 1), :] = d_k
            w_ref[0, pl.ds(k, 1), :] = w_k

            # remove selected point from the candidate pool
            z_masked = jnp.where(sel_mask, INF, z_masked)
            return z_masked, wsel, cum, wsum, zwsum

        carry = (
            z_masked0,
            jnp.zeros((N, TP), jnp.float32),   # wsel
            jnp.ones((1, TP), jnp.float32),    # cum (1 - alpha) product
            jnp.zeros((1, TP), jnp.float32),   # wsum
            jnp.zeros((1, TP), jnp.float32),   # zwsum
        )
        if K <= 4:
            for k in range(K):
                carry = body(k, carry)
        else:
            carry = jax.lax.fori_loop(0, K, body, carry)
        _, wsel, _, wsum, zwsum = carry

        # Single MXU matmul for compositing (one-hot-weighted gather).
        featsT = featsT_ref[0]                 # (F, N)
        acc = jnp.dot(featsT.astype(matmul_dtype), wsel.astype(matmul_dtype),
                      preferred_element_type=jnp.float32)            # (F, TP)
        if compositor == "norm_weighted_sum":
            # TODO(synk): pytorch3d uses its own internal eps here; 1e-9 used.
            acc = acc / jnp.maximum(wsum, 1e-9)

        feat_ref[0] = acc
        depth_ref[0] = zwsum / jnp.maximum(wsum, 1e-9)

    return kernel


def points_renderer(points, features, *, render_size, points_per_pixel, radius,
                    weight_calculation="exponential", compositor="alpha",
                    precise_matmul=False):
    """points: (B, N, 3) f32 in NDC, features: (B, N, F) f32."""
    points = points.astype(jnp.float32)
    features = features.astype(jnp.float32)
    B, N, _ = points.shape
    F = features.shape[-1]
    S = int(render_size)
    K = int(points_per_pixel)
    P = S * S
    r = 2.0 * float(radius) / float(S)

    TP = _choose_pixel_tile(P, N)
    T = P // TP

    featsT = jnp.transpose(features, (0, 2, 1))                     # (B, F, N)

    # Pixel-center NDC coordinates (pytorch3d convention: +x left, +y up),
    # precomputed once on the host side; flattened pixel index p = h*S + w.
    axis = 1.0 - 2.0 * (jnp.arange(S, dtype=jnp.float32) + 0.5) / float(S)
    ndc_y = jnp.repeat(axis, S)                                     # varies with h
    ndc_x = jnp.tile(axis, S)                                       # varies with w
    ndc = jnp.stack([ndc_x, ndc_y], axis=0)                         # (2, P)

    matmul_dtype = jnp.float32 if precise_matmul else jnp.bfloat16
    kernel = _make_kernel(N, F, K, TP, r, weight_calculation, compositor,
                          matmul_dtype)

    out_shapes = (
        jax.ShapeDtypeStruct((B, K, P), jnp.int32),    # idx (packed, -1 empty; int32 not int64)
        jax.ShapeDtypeStruct((B, K, P), jnp.float32),  # zbuf
        jax.ShapeDtypeStruct((B, K, P), jnp.float32),  # dist_xy
        jax.ShapeDtypeStruct((B, K, P), jnp.float32),  # weights (alphas)
        jax.ShapeDtypeStruct((B, F, P), jnp.float32),  # composited features
        jax.ShapeDtypeStruct((B, 1, P), jnp.float32),  # depth
    )
    grid_spec = pltpu.PrefetchScalarGridSpec(
        num_scalar_prefetch=0,
        grid=(B, T),
        in_specs=[
            pl.BlockSpec((2, TP), lambda b, t: (0, t)),       # ndc (tiled)
            pl.BlockSpec((1, N, 3), lambda b, t: (b, 0, 0)),  # points (resident)
            pl.BlockSpec((1, F, N), lambda b, t: (b, 0, 0)),  # featsT (resident)
        ],
        out_specs=[
            pl.BlockSpec((1, K, TP), lambda b, t: (b, 0, t)),
            pl.BlockSpec((1, K, TP), lambda b, t: (b, 0, t)),
            pl.BlockSpec((1, K, TP), lambda b, t: (b, 0, t)),
            pl.BlockSpec((1, K, TP), lambda b, t: (b, 0, t)),
            pl.BlockSpec((1, F, TP), lambda b, t: (b, 0, t)),
            pl.BlockSpec((1, 1, TP), lambda b, t: (b, 0, t)),
        ],
    )
    idx_kp, zbuf_kp, dist_kp, w_kp, feats_fp, depth_1p = pl.pallas_call(
        kernel,
        out_shape=out_shapes,
        grid_spec=grid_spec,
        compiler_params=pltpu.CompilerParams(
            dimension_semantics=("parallel", "parallel"),
            vmem_limit_bytes=48 * 1024 * 1024,
        ),
    )(ndc, points, featsT)

    # Glue: reshape / permute to the PyTorch module's conventions.
    idx = idx_kp.reshape(B, K, S, S)                                   # (B,K,S,S)
    zbuf = jnp.transpose(zbuf_kp.reshape(B, K, S, S), (0, 2, 3, 1))    # (B,S,S,K)
    dist_xy = jnp.transpose(dist_kp.reshape(B, K, S, S), (0, 2, 3, 1))  # (B,S,S,K)
    alphas = w_kp.reshape(B, K, S, S)                                  # (B,K,S,S)
    feats_out = feats_fp.reshape(B, F, S, S)                           # (B,F,S,S)
    depth = depth_1p.reshape(B, 1, S, S)                               # (B,1,S,S)

    valid_pts_all = (idx >= 0).astype(jnp.float32)                     # (B,K,S,S)
    valid_ray = valid_pts_all[:, 0]                                    # (B,S,S)

    return {
        "raster_output": {
            "idx": idx,
            "zbuf": zbuf,
            "dist_xy": dist_xy,
            "alphas": alphas,
            "points": points,
            "feats": features,
        },
        "feats": feats_out,
        "depth": depth,
        "mask": valid_ray,
        "valid_rays": valid_ray.mean(axis=(1, 2)),
        "valid_pts": valid_pts_all.mean(axis=(1, 2, 3)),
    }


if __name__ == "__main__":
    key = jax.random.PRNGKey(0)
    k1, k2, k3 = jax.random.split(key, 3)

    B, N, F = 2, 8, 4          # batch, points, feature channels
    S, K, radius = 16, 4, 2.0  # render_size, points_per_pixel, cfg.radius

    xy = jax.random.uniform(k1, (B, N, 2), minval=-0.8, maxval=0.8)
    z = jax.random.uniform(k2, (B, N, 1), minval=0.5, maxval=2.0)
    points = jnp.concatenate([xy, z], axis=-1).astype(jnp.float32)     # (B, N, 3)
    features = jax.random.uniform(k3, (B, N, F), dtype=jnp.float32)    # (B, N, F)

    out = points_renderer(points, features,
                          render_size=S, points_per_pixel=K, radius=radius,
                          weight_calculation="exponential", compositor="alpha")
    jax.tree_util.tree_map(jax.block_until_ready, out)

    print("KERNEL_OK")
</pallas_src>

<mosaic_0001>
module attributes {stable_mosaic.version = 11 : i64} {
  func.func @kernel(%arg0: i32, %arg1: i32, %arg2: memref<2x256xf32, #tpu.memory_space<vmem>>, %arg3: memref<1x8x3xf32, #tpu.memory_space<vmem>>, %arg4: memref<1x4x8xf32, #tpu.memory_space<vmem>>, %arg5: memref<1x4x256xi32, #tpu.memory_space<vmem>>, %arg6: memref<1x4x256xf32, #tpu.memory_space<vmem>>, %arg7: memref<1x4x256xf32, #tpu.memory_space<vmem>>, %arg8: memref<1x4x256xf32, #tpu.memory_space<vmem>>, %arg9: memref<1x4x256xf32, #tpu.memory_space<vmem>>, %arg10: memref<1x1x256xf32, #tpu.memory_space<vmem>>) attributes {dimension_semantics = [#tpu.dimension_semantics<parallel>, #tpu.dimension_semantics<parallel>], iteration_bounds = array<i64: 2, 1>, scalar_prefetch = 0 : i64, scratch_operands = 0 : i64, tpu.core_type = #tpu.core_type<tc>, window_params = [{transform_indices = @transform_0, window_bounds = array<i64: 2, 256>}, {transform_indices = @transform_1, window_bounds = array<i64: 1, 8, 3>}, {transform_indices = @transform_2, window_bounds = array<i64: 1, 4, 8>}, {transform_indices = @transform_3, window_bounds = array<i64: 1, 4, 256>}, {transform_indices = @transform_4, window_bounds = array<i64: 1, 4, 256>}, {transform_indices = @transform_5, window_bounds = array<i64: 1, 4, 256>}, {transform_indices = @transform_6, window_bounds = array<i64: 1, 4, 256>}, {transform_indices = @transform_7, window_bounds = array<i64: 1, 4, 256>}, {transform_indices = @transform_8, window_bounds = array<i64: 1, 1, 256>}]} {
    %c0 = arith.constant 0 : index
    %c0_0 = arith.constant 0 : index
    %c0_1 = arith.constant 0 : index
    %0 = vector.load %arg3[%c0, %c0_0, %c0_1] : memref<1x8x3xf32, #tpu.memory_space<vmem>>, vector<1x8x3xf32>
    %1 = vector.shape_cast %0 : vector<1x8x3xf32> to vector<8x3xf32>
    %2 = vector.extract_strided_slice %1 {offsets = [0, 0], sizes = [8, 1], strides = [1, 1]} : vector<8x3xf32> to vector<8x1xf32>
    %3 = vector.extract_strided_slice %1 {offsets = [0, 1], sizes = [8, 1], strides = [1, 1]} : vector<8x3xf32> to vector<8x1xf32>
    %4 = vector.extract_strided_slice %1 {offsets = [0, 2], sizes = [8, 1], strides = [1, 1]} : vector<8x3xf32> to vector<8x1xf32>
    %c0_2 = arith.constant 0 : index
    %c0_3 = arith.constant 0 : index
    %5 = vector.load %arg2[%c0_2, %c0_3] : memref<2x256xf32, #tpu.memory_space<vmem>>, vector<1x256xf32>
    %c1 = arith.constant 1 : index
    %c0_4 = arith.constant 0 : index
    %6 = vector.load %arg2[%c1, %c0_4] : memref<2x256xf32, #tpu.memory_space<vmem>>, vector<1x256xf32>
    %7 = vector.broadcast %2 : vector<8x1xf32> to vector<8x256xf32>
    %8 = vector.broadcast %5 : vector<1x256xf32> to vector<8x256xf32>
    %9 = arith.subf %7, %8 : vector<8x256xf32>
    %10 = vector.broadcast %3 : vector<8x1xf32> to vector<8x256xf32>
    %11 = vector.broadcast %6 : vector<1x256xf32> to vector<8x256xf32>
    %12 = arith.subf %10, %11 : vector<8x256xf32>
    %13 = arith.mulf %9, %9 : vector<8x256xf32>
    %14 = arith.mulf %12, %12 : vector<8x256xf32>
    %15 = arith.addf %13, %14 : vector<8x256xf32>
    %cst = arith.constant 6.250000e-02 : f32
    %16 = vector.broadcast %cst : f32 to vector<8x256xf32>
    %17 = arith.cmpf ole, %15, %16 : vector<8x256xf32>
    %cst_5 = arith.constant 0.000000e+00 : f32
    %18 = vector.broadcast %cst_5 : f32 to vector<8x1xf32>
    %19 = arith.cmpf oge, %4, %18 : vector<8x1xf32>
    %20 = vector.broadcast %19 : vector<8x1xi1> to vector<8x256xi1>
    %21 = arith.andi %17, %20 : vector<8x256xi1>
    %cst_6 = arith.constant 0x7F800000 : f32
    %22 = vector.shape_cast %4 : vector<8x1xf32> to vector<8x1xf32>
    %23 = vector.broadcast %22 : vector<8x1xf32> to vector<8x256xf32>
    %24 = vector.broadcast %cst_6 : f32 to vector<8x256xf32>
    %25 = arith.select %21, %23, %24 : vector<8x256xi1>, vector<8x256xf32>
    %26 = tpu.iota {dimensions = array<i32: 0>} : vector<8x256xi32>
    %cst_7 = arith.constant 0.000000e+00 : f32
    %27 = vector.broadcast %cst_7 : f32 to vector<8x256xf32>
    %cst_8 = arith.constant 1.000000e+00 : f32
    %28 = vector.broadcast %cst_8 : f32 to vector<1x256xf32>
    %cst_9 = arith.constant 0.000000e+00 : f32
    %29 = vector.broadcast %cst_9 : f32 to vector<1x256xf32>
    %cst_10 = arith.constant 0.000000e+00 : f32
    %30 = vector.broadcast %cst_10 : f32 to vector<1x256xf32>
    %cst_11 = arith.constant dense<0x7F800000> : vector<256xf32>
    %31 = vector.multi_reduction <minimumf>, %25, %cst_11 [0] : vector<8x256xf32> to vector<256xf32>
    %32 = vector.shape_cast %31 : vector<256xf32> to vector<1x256xf32>
    %cst_12 = arith.constant 0x7F800000 : f32
    %33 = vector.broadcast %cst_12 : f32 to vector<1x256xf32>
    %34 = arith.cmpf olt, %32, %33 : vector<1x256xf32>
    %35 = vector.broadcast %32 : vector<1x256xf32> to vector<8x256xf32>
    %36 = arith.cmpf oeq, %25, %35 : vector<8x256xf32>
    %37 = vector.broadcast %34 : vector<1x256xi1> to vector<8x256xi1>
    %38 = arith.andi %36, %37 : vector<8x256xi1>
    %c8_i32 = arith.constant 8 : i32
    %39 = vector.broadcast %c8_i32 : i32 to vector<8x256xi32>
    %40 = arith.select %38, %26, %39 : vector<8x256xi1>, vector<8x256xi32>
    %cst_13 = arith.constant dense<2147483647> : vector<256xi32>
    %41 = vector.multi_reduction <minsi>, %40, %cst_13 [0] : vector<8x256xi32> to vector<256xi32>
    %42 = vector.shape_cast %41 : vector<256xi32> to vector<1x256xi32>
    %43 = vector.broadcast %42 : vector<1x256xi32> to vector<8x256xi32>
    %44 = arith.cmpi eq, %26, %43 : vector<8x256xi32>
    %cst_14 = arith.constant 0.000000e+00 : f32
    %45 = vector.broadcast %cst_14 : f32 to vector<8x256xf32>
    %46 = arith.select %44, %15, %45 : vector<8x256xi1>, vector<8x256xf32>
    %cst_15 = arith.constant dense<0.000000e+00> : vector<256xf32>
    %47 = vector.multi_reduction <add>, %46, %cst_15 [0] : vector<8x256xf32> to vector<256xf32>
    %48 = vector.shape_cast %47 : vector<256xf32> to vector<1x256xf32>
    %cst_16 = arith.constant -1.000000e+00 : f32
    %49 = vector.broadcast %cst_16 : f32 to vector<1x256xf32>
    %50 = arith.select %34, %48, %49 : vector<1x256xi1>, vector<1x256xf32>
    %cst_17 = arith.constant -1.000000e+00 : f32
    %51 = vector.broadcast %cst_17 : f32 to vector<1x256xf32>
    %52 = arith.select %34, %32, %51 : vector<1x256xi1>, vector<1x256xf32>
    %c8_i32_18 = arith.constant 8 : i32
    %53 = arith.muli %arg0, %c8_i32_18 : i32
    %54 = vector.broadcast %53 : i32 to vector<1x256xi32>
    %55 = arith.addi %54, %42 : vector<1x256xi32>
    %c-1_i32 = arith.constant -1 : i32
    %56 = vector.broadcast %c-1_i32 : i32 to vector<1x256xi32>
    %57 = arith.select %34, %55, %56 : vector<1x256xi1>, vector<1x256xi32>
    %cst_19 = arith.constant 1.600000e+01 : f32
    %58 = vector.broadcast %cst_19 : f32 to vector<1x256xf32>
    %59 = arith.mulf %50, %58 : vector<1x256xf32>
    %cst_20 = arith.constant 0.000000e+00 : f32
    %60 = vector.broadcast %cst_20 : f32 to vector<1x256xf32>
    %61 = arith.maximumf %59, %60 : vector<1x256xf32>
    %cst_21 = arith.constant 0.000000e+00 : f32
    %62 = vector.broadcast %cst_21 : f32 to vector<1x256xf32>
    %63 = arith.subf %62, %61 : vector<1x256xf32>
    %64 = math.exp %63 : vector<1x256xf32>
    %cst_22 = arith.constant 0.000000e+00 : f32
    %cst_23 = arith.constant 9.900000e-01 : f32
    %65 = vector.broadcast %cst_22 : f32 to vector<1x256xf32>
    %66 = arith.maximumf %65, %64 : vector<1x256xf32>
    %67 = vector.broadcast %cst_23 : f32 to vector<1x256xf32>
    %68 = arith.minimumf %67, %66 : vector<1x256xf32>
    %cst_24 = arith.constant 0.000000e+00 : f32
    %69 = vector.broadcast %cst_24 : f32 to vector<1x256xf32>
    %70 = arith.select %34, %68, %69 : vector<1x256xi1>, vector<1x256xf32>
    %71 = arith.mulf %28, %70 : vector<1x256xf32>
    %cst_25 = arith.constant 1.000000e+00 : f32
    %72 = vector.broadcast %cst_25 : f32 to vector<1x256xf32>
    %73 = arith.subf %72, %70 : vector<1x256xf32>
    %74 = arith.mulf %28, %73 : vector<1x256xf32>
    %75 = arith.extui %44 : vector<8x256xi1> to vector<8x256xi32>
    %76 = arith.sitofp %75 : vector<8x256xi32> to vector<8x256xf32>
    %77 = vector.broadcast %71 : vector<1x256xf32> to vector<8x256xf32>
    %78 = arith.mulf %77, %76 : vector<8x256xf32>
    %79 = arith.addf %27, %78 : vector<8x256xf32>
    %80 = arith.addf %29, %70 : vector<1x256xf32>
    %81 = arith.mulf %52, %70 : vector<1x256xf32>
    %82 = arith.addf %30, %81 : vector<1x256xf32>
    %c0_26 = arith.constant 0 : index
    %c0_27 = arith.constant 0 : index
    %c0_28 = arith.constant 0 : index
    %83 = vector.load %arg5[%c0_26, %c0_27, %c0_28] : memref<1x4x256xi32, #tpu.memory_space<vmem>>, vector<1x1x256xi32>
    %84 = vector.shape_cast %83 : vector<1x1x256xi32> to vector<1x256xi32>
    %85 = vector.shape_cast %57 : vector<1x256xi32> to vector<1x1x256xi32>
    tpu.vector_store %arg5[%c0_26, %c0_27, %c0_28], %85 {strides = array<i32>} : memref<1x4x256xi32, #tpu.memory_space<vmem>>, vector<1x1x256xi32>,
    %c0_29 = arith.constant 0 : index
    %c0_30 = arith.constant 0 : index
    %c0_31 = arith.constant 0 : index
    %86 = vector.load %arg6[%c0_29, %c0_30, %c0_31] : memref<1x4x256xf32, #tpu.memory_space<vmem>>, vector<1x1x256xf32>
    %87 = vector.shape_cast %86 : vector<1x1x256xf32> to vector<1x256xf32>
    %88 = vector.shape_cast %52 : vector<1x256xf32> to vector<1x1x256xf32>
    tpu.vector_store %arg6[%c0_29, %c0_30, %c0_31], %88 {strides = array<i32>} : memref<1x4x256xf32, #tpu.memory_space<vmem>>, vector<1x1x256xf32>,
    %c0_32 = arith.constant 0 : index
    %c0_33 = arith.constant 0 : index
    %c0_34 = arith.constant 0 : index
    %89 = vector.load %arg7[%c0_32, %c0_33, %c0_34] : memref<1x4x256xf32, #tpu.memory_space<vmem>>, vector<1x1x256xf32>
    %90 = vector.shape_cast %89 : vector<1x1x256xf32> to vector<1x256xf32>
    %91 = vector.shape_cast %50 : vector<1x256xf32> to vector<1x1x256xf32>
    tpu.vector_store %arg7[%c0_32, %c0_33, %c0_34], %91 {strides = array<i32>} : memref<1x4x256xf32, #tpu.memory_space<vmem>>, vector<1x1x256xf32>,
    %c0_35 = arith.constant 0 : index
    %c0_36 = arith.constant 0 : index
    %c0_37 = arith.constant 0 : index
    %92 = vector.load %arg8[%c0_35, %c0_36, %c0_37] : memref<1x4x256xf32, #tpu.memory_space<vmem>>, vector<1x1x256xf32>
    %93 = vector.shape_cast %92 : vector<1x1x256xf32> to vector<1x256xf32>
    %94 = vector.shape_cast %68 : vector<1x256xf32> to vector<1x1x256xf32>
    tpu.vector_store %arg8[%c0_35, %c0_36, %c0_37], %94 {strides = array<i32>} : memref<1x4x256xf32, #tpu.memory_space<vmem>>, vector<1x1x256xf32>,
    %cst_38 = arith.constant 0x7F800000 : f32
    %95 = vector.broadcast %cst_38 : f32 to vector<8x256xf32>
    %96 = arith.select %44, %95, %25 : vector<8x256xi1>, vector<8x256xf32>
    %cst_39 = arith.constant dense<0x7F800000> : vector<256xf32>
    %97 = vector.multi_reduction <minimumf>, %96, %cst_39 [0] : vector<8x256xf32> to vector<256xf32>
    %98 = vector.shape_cast %97 : vector<256xf32> to vector<1x256xf32>
    %cst_40 = arith.constant 0x7F800000 : f32
    %99 = vector.broadcast %cst_40 : f32 to vector<1x256xf32>
    %100 = arith.cmpf olt, %98, %99 : vector<1x256xf32>
    %101 = vector.broadcast %98 : vector<1x256xf32> to vector<8x256xf32>
    %102 = arith.cmpf oeq, %96, %101 : vector<8x256xf32>
    %103 = vector.broadcast %100 : vector<1x256xi1> to vector<8x256xi1>
    %104 = arith.andi %102, %103 : vector<8x256xi1>
    %c8_i32_41 = arith.constant 8 : i32
    %105 = vector.broadcast %c8_i32_41 : i32 to vector<8x256xi32>
    %106 = arith.select %104, %26, %105 : vector<8x256xi1>, vector<8x256xi32>
    %cst_42 = arith.constant dense<2147483647> : vector<256xi32>
    %107 = vector.multi_reduction <minsi>, %106, %cst_42 [0] : vector<8x256xi32> to vector<256xi32>
    %108 = vector.shape_cast %107 : vector<256xi32> to vector<1x256xi32>
    %109 = vector.broadcast %108 : vector<1x256xi32> to vector<8x256xi32>
    %110 = arith.cmpi eq, %26, %109 : vector<8x256xi32>
    %cst_43 = arith.constant 0.000000e+00 : f32
    %111 = vector.broadcast %cst_43 : f32 to vector<8x256xf32>
    %112 = arith.select %110, %15, %111 : vector<8x256xi1>, vector<8x256xf32>
    %cst_44 = arith.constant dense<0.000000e+00> : vector<256xf32>
    %113 = vector.multi_reduction <add>, %112, %cst_44 [0] : vector<8x256xf32> to vector<256xf32>
    %114 = vector.shape_cast %113 : vector<256xf32> to vector<1x256xf32>
    %cst_45 = arith.constant -1.000000e+00 : f32
    %115 = vector.broadcast %cst_45 : f32 to vector<1x256xf32>
    %116 = arith.select %100, %114, %115 : vector<1x256xi1>, vector<1x256xf32>
    %cst_46 = arith.constant -1.000000e+00 : f32
    %117 = vector.broadcast %cst_46 : f32 to vector<1x256xf32>
    %118 = arith.select %100, %98, %117 : vector<1x256xi1>, vector<1x256xf32>
    %c8_i32_47 = arith.constant 8 : i32
    %119 = arith.muli %arg0, %c8_i32_47 : i32
    %120 = vector.broadcast %119 : i32 to vector<1x256xi32>
    %121 = arith.addi %120, %108 : vector<1x256xi32>
    %c-1_i32_48 = arith.constant -1 : i32
    %122 = vector.broadcast %c-1_i32_48 : i32 to vector<1x256xi32>
    %123 = arith.select %100, %121, %122 : vector<1x256xi1>, vector<1x256xi32>
    %cst_49 = arith.constant 1.600000e+01 : f32
    %124 = vector.broadcast %cst_49 : f32 to vector<1x256xf32>
    %125 = arith.mulf %116, %124 : vector<1x256xf32>
    %cst_50 = arith.constant 0.000000e+00 : f32
    %126 = vector.broadcast %cst_50 : f32 to vector<1x256xf32>
    %127 = arith.maximumf %125, %126 : vector<1x256xf32>
    %cst_51 = arith.constant 0.000000e+00 : f32
    %128 = vector.broadcast %cst_51 : f32 to vector<1x256xf32>
    %129 = arith.subf %128, %127 : vector<1x256xf32>
    %130 = math.exp %129 : vector<1x256xf32>
    %cst_52 = arith.constant 0.000000e+00 : f32
    %cst_53 = arith.constant 9.900000e-01 : f32
    %131 = vector.broadcast %cst_52 : f32 to vector<1x256xf32>
    %132 = arith.maximumf %131, %130 : vector<1x256xf32>
    %133 = vector.broadcast %cst_53 : f32 to vector<1x256xf32>
    %134 = arith.minimumf %133, %132 : vector<1x256xf32>
    %cst_54 = arith.constant 0.000000e+00 : f32
    %135 = vector.broadcast %cst_54 : f32 to vector<1x256xf32>
    %136 = arith.select %100, %134, %135 : vector<1x256xi1>, vector<1x256xf32>
    %137 = arith.mulf %74, %136 : vector<1x256xf32>
    %cst_55 = arith.constant 1.000000e+00 : f32
    %138 = vector.broadcast %cst_55 : f32 to vector<1x256xf32>
    %139 = arith.subf %138, %136 : vector<1x256xf32>
    %140 = arith.mulf %74, %139 : vector<1x256xf32>
    %141 = arith.extui %110 : vector<8x256xi1> to vector<8x256xi32>
    %142 = arith.sitofp %141 : vector<8x256xi32> to vector<8x256xf32>
    %143 = vector.broadcast %137 : vector<1x256xf32> to vector<8x256xf32>
    %144 = arith.mulf %143, %142 : vector<8x256xf32>
    %145 = arith.addf %79, %144 : vector<8x256xf32>
    %146 = arith.addf %80, %136 : vector<1x256xf32>
    %147 = arith.mulf %118, %136 : vector<1x256xf32>
    %148 = arith.addf %82, %147 : vector<1x256xf32>
    %c0_56 = arith.constant 0 : index
    %c1_57 = arith.constant 1 : index
    %c0_58 = arith.constant 0 : index
    %149 = vector.load %arg5[%c0_56, %c1_57, %c0_58] : memref<1x4x256xi32, #tpu.memory_space<vmem>>, vector<1x1x256xi32>
    %150 = vector.shape_cast %149 : vector<1x1x256xi32> to vector<1x256xi32>
    %151 = vector.shape_cast %123 : vector<1x256xi32> to vector<1x1x256xi32>
    tpu.vector_store %arg5[%c0_56, %c1_57, %c0_58], %151 {strides = array<i32>} : memref<1x4x256xi32, #tpu.memory_space<vmem>>, vector<1x1x256xi32>,
    %c0_59 = arith.constant 0 : index
    %c1_60 = arith.constant 1 : index
    %c0_61 = arith.constant 0 : index
    %152 = vector.load %arg6[%c0_59, %c1_60, %c0_61] : memref<1x4x256xf32, #tpu.memory_space<vmem>>, vector<1x1x256xf32>
    %153 = vector.shape_cast %152 : vector<1x1x256xf32> to vector<1x256xf32>
    %154 = vector.shape_cast %118 : vector<1x256xf32> to vector<1x1x256xf32>
    tpu.vector_store %arg6[%c0_59, %c1_60, %c0_61], %154 {strides = array<i32>} : memref<1x4x256xf32, #tpu.memory_space<vmem>>, vector<1x1x256xf32>,
    %c0_62 = arith.constant 0 : index
    %c1_63 = arith.constant 1 : index
    %c0_64 = arith.constant 0 : index
    %155 = vector.load %arg7[%c0_62, %c1_63, %c0_64] : memref<1x4x256xf32, #tpu.memory_space<vmem>>, vector<1x1x256xf32>
    %156 = vector.shape_cast %155 : vector<1x1x256xf32> to vector<1x256xf32>
    %157 = vector.shape_cast %116 : vector<1x256xf32> to vector<1x1x256xf32>
    tpu.vector_store %arg7[%c0_62, %c1_63, %c0_64], %157 {strides = array<i32>} : memref<1x4x256xf32, #tpu.memory_space<vmem>>, vector<1x1x256xf32>,
    %c0_65 = arith.constant 0 : index
    %c1_66 = arith.constant 1 : index
    %c0_67 = arith.constant 0 : index
    %158 = vector.load %arg8[%c0_65, %c1_66, %c0_67] : memref<1x4x256xf32, #tpu.memory_space<vmem>>, vector<1x1x256xf32>
    %159 = vector.shape_cast %158 : vector<1x1x256xf32> to vector<1x256xf32>
    %160 = vector.shape_cast %134 : vector<1x256xf32> to vector<1x1x256xf32>
    tpu.vector_store %arg8[%c0_65, %c1_66, %c0_67], %160 {strides = array<i32>} : memref<1x4x256xf32, #tpu.memory_space<vmem>>, vector<1x1x256xf32>,
    %cst_68 = arith.constant 0x7F800000 : f32
    %161 = vector.broadcast %cst_68 : f32 to vector<8x256xf32>
    %162 = arith.select %110, %161, %96 : vector<8x256xi1>, vector<8x256xf32>
    %cst_69 = arith.constant dense<0x7F800000> : vector<256xf32>
    %163 = vector.multi_reduction <minimumf>, %162, %cst_69 [0] : vector<8x256xf32> to vector<256xf32>
    %164 = vector.shape_cast %163 : vector<256xf32> to vector<1x256xf32>
    %cst_70 = arith.constant 0x7F800000 : f32
    %165 = vector.broadcast %cst_70 : f32 to vector<1x256xf32>
    %166 = arith.cmpf olt, %164, %165 : vector<1x256xf32>
    %167 = vector.broadcast %164 : vector<1x256xf32> to vector<8x256xf32>
    %168 = arith.cmpf oeq, %162, %167 : vector<8x256xf32>
    %169 = vector.broadcast %166 : vector<1x256xi1> to vector<8x256xi1>
    %170 = arith.andi %168, %169 : vector<8x256xi1>
    %c8_i32_71 = arith.constant 8 : i32
    %171 = vector.broadcast %c8_i32_71 : i32 to vector<8x256xi32>
    %172 = arith.select %170, %26, %171 : vector<8x256xi1>, vector<8x256xi32>
    %cst_72 = arith.constant dense<2147483647> : vector<256xi32>
    %173 = vector.multi_reduction <minsi>, %172, %cst_72 [0] : vector<8x256xi32> to vector<256xi32>
    %174 = vector.shape_cast %173 : vector<256xi32> to vector<1x256xi32>
    %175 = vector.broadcast %174 : vector<1x256xi32> to vector<8x256xi32>
    %176 = arith.cmpi eq, %26, %175 : vector<8x256xi32>
    %cst_73 = arith.constant 0.000000e+00 : f32
    %177 = vector.broadcast %cst_73 : f32 to vector<8x256xf32>
    %178 = arith.select %176, %15, %177 : vector<8x256xi1>, vector<8x256xf32>
    %cst_74 = arith.constant dense<0.000000e+00> : vector<256xf32>
    %179 = vector.multi_reduction <add>, %178, %cst_74 [0] : vector<8x256xf32> to vector<256xf32>
    %180 = vector.shape_cast %179 : vector<256xf32> to vector<1x256xf32>
    %cst_75 = arith.constant -1.000000e+00 : f32
    %181 = vector.broadcast %cst_75 : f32 to vector<1x256xf32>
    %182 = arith.select %166, %180, %181 : vector<1x256xi1>, vector<1x256xf32>
    %cst_76 = arith.constant -1.000000e+00 : f32
    %183 = vector.broadcast %cst_76 : f32 to vector<1x256xf32>
    %184 = arith.select %166, %164, %183 : vector<1x256xi1>, vector<1x256xf32>
    %c8_i32_77 = arith.constant 8 : i32
    %185 = arith.muli %arg0, %c8_i32_77 : i32
    %186 = vector.broadcast %185 : i32 to vector<1x256xi32>
    %187 = arith.addi %186, %174 : vector<1x256xi32>
    %c-1_i32_78 = arith.constant -1 : i32
    %188 = vector.broadcast %c-1_i32_78 : i32 to vector<1x256xi32>
    %189 = arith.select %166, %187, %188 : vector<1x256xi1>, vector<1x256xi32>
    %cst_79 = arith.constant 1.600000e+01 : f32
    %190 = vector.broadcast %cst_79 : f32 to vector<1x256xf32>
    %191 = arith.mulf %182, %190 : vector<1x256xf32>
    %cst_80 = arith.constant 0.000000e+00 : f32
    %192 = vector.broadcast %cst_80 : f32 to vector<1x256xf32>
    %193 = arith.maximumf %191, %192 : vector<1x256xf32>
    %cst_81 = arith.constant 0.000000e+00 : f32
    %194 = vector.broadcast %cst_81 : f32 to vector<1x256xf32>
    %195 = arith.subf %194, %193 : vector<1x256xf32>
    %196 = math.exp %195 : vector<1x256xf32>
    %cst_82 = arith.constant 0.000000e+00 : f32
    %cst_83 = arith.constant 9.900000e-01 : f32
    %197 = vector.broadcast %cst_82 : f32 to vector<1x256xf32>
    %198 = arith.maximumf %197, %196 : vector<1x256xf32>
    %199 = vector.broadcast %cst_83 : f32 to vector<1x256xf32>
    %200 = arith.minimumf %199, %198 : vector<1x256xf32>
    %cst_84 = arith.constant 0.000000e+00 : f32
    %201 = vector.broadcast %cst_84 : f32 to vector<1x256xf32>
    %202 = arith.select %166, %200, %201 : vector<1x256xi1>, vector<1x256xf32>
    %203 = arith.mulf %140, %202 : vector<1x256xf32>
    %cst_85 = arith.constant 1.000000e+00 : f32
    %204 = vector.broadcast %cst_85 : f32 to vector<1x256xf32>
    %205 = arith.subf %204, %202 : vector<1x256xf32>
    %206 = arith.mulf %140, %205 : vector<1x256xf32>
    %207 = arith.extui %176 : vector<8x256xi1> to vector<8x256xi32>
    %208 = arith.sitofp %207 : vector<8x256xi32> to vector<8x256xf32>
    %209 = vector.broadcast %203 : vector<1x256xf32> to vector<8x256xf32>
    %210 = arith.mulf %209, %208 : vector<8x256xf32>
    %211 = arith.addf %145, %210 : vector<8x256xf32>
    %212 = arith.addf %146, %202 : vector<1x256xf32>
    %213 = arith.mulf %184, %202 : vector<1x256xf32>
    %214 = arith.addf %148, %213 : vector<1x256xf32>
    %c0_86 = arith.constant 0 : index
    %c2 = arith.constant 2 : index
    %c0_87 = arith.constant 0 : index
    %215 = vector.load %arg5[%c0_86, %c2, %c0_87] : memref<1x4x256xi32, #tpu.memory_space<vmem>>, vector<1x1x256xi32>
    %216 = vector.shape_cast %215 : vector<1x1x256xi32> to vector<1x256xi32>
    %217 = vector.shape_cast %189 : vector<1x256xi32> to vector<1x1x256xi32>
    tpu.vector_store %arg5[%c0_86, %c2, %c0_87], %217 {strides = array<i32>} : memref<1x4x256xi32, #tpu.memory_space<vmem>>, vector<1x1x256xi32>,
    %c0_88 = arith.constant 0 : index
    %c2_89 = arith.constant 2 : index
    %c0_90 = arith.constant 0 : index
    %218 = vector.load %arg6[%c0_88, %c2_89, %c0_90] : memref<1x4x256xf32, #tpu.memory_space<vmem>>, vector<1x1x256xf32>
    %219 = vector.shape_cast %218 : vector<1x1x256xf32> to vector<1x256xf32>
    %220 = vector.shape_cast %184 : vector<1x256xf32> to vector<1x1x256xf32>
    tpu.vector_store %arg6[%c0_88, %c2_89, %c0_90], %220 {strides = array<i32>} : memref<1x4x256xf32, #tpu.memory_space<vmem>>, vector<1x1x256xf32>,
    %c0_91 = arith.constant 0 : index
    %c2_92 = arith.constant 2 : index
    %c0_93 = arith.constant 0 : index
    %221 = vector.load %arg7[%c0_91, %c2_92, %c0_93] : memref<1x4x256xf32, #tpu.memory_space<vmem>>, vector<1x1x256xf32>
    %222 = vector.shape_cast %221 : vector<1x1x256xf32> to vector<1x256xf32>
    %223 = vector.shape_cast %182 : vector<1x256xf32> to vector<1x1x256xf32>
    tpu.vector_store %arg7[%c0_91, %c2_92, %c0_93], %223 {strides = array<i32>} : memref<1x4x256xf32, #tpu.memory_space<vmem>>, vector<1x1x256xf32>,
    %c0_94 = arith.constant 0 : index
    %c2_95 = arith.constant 2 : index
    %c0_96 = arith.constant 0 : index
    %224 = vector.load %arg8[%c0_94, %c2_95, %c0_96] : memref<1x4x256xf32, #tpu.memory_space<vmem>>, vector<1x1x256xf32>
    %225 = vector.shape_cast %224 : vector<1x1x256xf32> to vector<1x256xf32>
    %226 = vector.shape_cast %200 : vector<1x256xf32> to vector<1x1x256xf32>
    tpu.vector_store %arg8[%c0_94, %c2_95, %c0_96], %226 {strides = array<i32>} : memref<1x4x256xf32, #tpu.memory_space<vmem>>, vector<1x1x256xf32>,
    %cst_97 = arith.constant 0x7F800000 : f32
    %227 = vector.broadcast %cst_97 : f32 to vector<8x256xf32>
    %228 = arith.select %176, %227, %162 : vector<8x256xi1>, vector<8x256xf32>
    %cst_98 = arith.constant dense<0x7F800000> : vector<256xf32>
    %229 = vector.multi_reduction <minimumf>, %228, %cst_98 [0] : vector<8x256xf32> to vector<256xf32>
    %230 = vector.shape_cast %229 : vector<256xf32> to vector<1x256xf32>
    %cst_99 = arith.constant 0x7F800000 : f32
    %231 = vector.broadcast %cst_99 : f32 to vector<1x256xf32>
    %232 = arith.cmpf olt, %230, %231 : vector<1x256xf32>
    %233 = vector.broadcast %230 : vector<1x256xf32> to vector<8x256xf32>
    %234 = arith.cmpf oeq, %228, %233 : vector<8x256xf32>
    %235 = vector.broadcast %232 : vector<1x256xi1> to vector<8x256xi1>
    %236 = arith.andi %234, %235 : vector<8x256xi1>
    %c8_i32_100 = arith.constant 8 : i32
    %237 = vector.broadcast %c8_i32_100 : i32 to vector<8x256xi32>
    %238 = arith.select %236, %26, %237 : vector<8x256xi1>, vector<8x256xi32>
    %cst_101 = arith.constant dense<2147483647> : vector<256xi32>
    %239 = vector.multi_reduction <minsi>, %238, %cst_101 [0] : vector<8x256xi32> to vector<256xi32>
    %240 = vector.shape_cast %239 : vector<256xi32> to vector<1x256xi32>
    %241 = vector.broadcast %240 : vector<1x256xi32> to vector<8x256xi32>
    %242 = arith.cmpi eq, %26, %241 : vector<8x256xi32>
    %cst_102 = arith.constant 0.000000e+00 : f32
    %243 = vector.broadcast %cst_102 : f32 to vector<8x256xf32>
    %244 = arith.select %242, %15, %243 : vector<8x256xi1>, vector<8x256xf32>
    %cst_103 = arith.constant dense<0.000000e+00> : vector<256xf32>
    %245 = vector.multi_reduction <add>, %244, %cst_103 [0] : vector<8x256xf32> to vector<256xf32>
    %246 = vector.shape_cast %245 : vector<256xf32> to vector<1x256xf32>
    %cst_104 = arith.constant -1.000000e+00 : f32
    %247 = vector.broadcast %cst_104 : f32 to vector<1x256xf32>
    %248 = arith.select %232, %246, %247 : vector<1x256xi1>, vector<1x256xf32>
    %cst_105 = arith.constant -1.000000e+00 : f32
    %249 = vector.broadcast %cst_105 : f32 to vector<1x256xf32>
    %250 = arith.select %232, %230, %249 : vector<1x256xi1>, vector<1x256xf32>
    %c8_i32_106 = arith.constant 8 : i32
    %251 = arith.muli %arg0, %c8_i32_106 : i32
    %252 = vector.broadcast %251 : i32 to vector<1x256xi32>
    %253 = arith.addi %252, %240 : vector<1x256xi32>
    %c-1_i32_107 = arith.constant -1 : i32
    %254 = vector.broadcast %c-1_i32_107 : i32 to vector<1x256xi32>
    %255 = arith.select %232, %253, %254 : vector<1x256xi1>, vector<1x256xi32>
    %cst_108 = arith.constant 1.600000e+01 : f32
    %256 = vector.broadcast %cst_108 : f32 to vector<1x256xf32>
    %257 = arith.mulf %248, %256 : vector<1x256xf32>
    %cst_109 = arith.constant 0.000000e+00 : f32
    %258 = vector.broadcast %cst_109 : f32 to vector<1x256xf32>
    %259 = arith.maximumf %257, %258 : vector<1x256xf32>
    %cst_110 = arith.constant 0.000000e+00 : f32
    %260 = vector.broadcast %cst_110 : f32 to vector<1x256xf32>
    %261 = arith.subf %260, %259 : vector<1x256xf32>
    %262 = math.exp %261 : vector<1x256xf32>
    %cst_111 = arith.constant 0.000000e+00 : f32
    %cst_112 = arith.constant 9.900000e-01 : f32
    %263 = vector.broadcast %cst_111 : f32 to vector<1x256xf32>
    %264 = arith.maximumf %263, %262 : vector<1x256xf32>
    %265 = vector.broadcast %cst_112 : f32 to vector<1x256xf32>
    %266 = arith.minimumf %265, %264 : vector<1x256xf32>
    %cst_113 = arith.constant 0.000000e+00 : f32
    %267 = vector.broadcast %cst_113 : f32 to vector<1x256xf32>
    %268 = arith.select %232, %266, %267 : vector<1x256xi1>, vector<1x256xf32>
    %269 = arith.mulf %206, %268 : vector<1x256xf32>
    %270 = arith.extui %242 : vector<8x256xi1> to vector<8x256xi32>
    %271 = arith.sitofp %270 : vector<8x256xi32> to vector<8x256xf32>
    %272 = vector.broadcast %269 : vector<1x256xf32> to vector<8x256xf32>
    %273 = arith.mulf %272, %271 : vector<8x256xf32>
    %274 = arith.addf %211, %273 : vector<8x256xf32>
    %275 = arith.addf %212, %268 : vector<1x256xf32>
    %276 = arith.mulf %250, %268 : vector<1x256xf32>
    %277 = arith.addf %214, %276 : vector<1x256xf32>
    %c0_114 = arith.constant 0 : index
    %c3 = arith.constant 3 : index
    %c0_115 = arith.constant 0 : index
    %278 = vector.load %arg5[%c0_114, %c3, %c0_115] : memref<1x4x256xi32, #tpu.memory_space<vmem>>, vector<1x1x256xi32>
    %279 = vector.shape_cast %278 : vector<1x1x256xi32> to vector<1x256xi32>
    %280 = vector.shape_cast %255 : vector<1x256xi32> to vector<1x1x256xi32>
    tpu.vector_store %arg5[%c0_114, %c3, %c0_115], %280 {strides = array<i32>} : memref<1x4x256xi32, #tpu.memory_space<vmem>>, vector<1x1x256xi32>,
    %c0_116 = arith.constant 0 : index
    %c3_117 = arith.constant 3 : index
    %c0_118 = arith.constant 0 : index
    %281 = vector.load %arg6[%c0_116, %c3_117, %c0_118] : memref<1x4x256xf32, #tpu.memory_space<vmem>>, vector<1x1x256xf32>
    %282 = vector.shape_cast %281 : vector<1x1x256xf32> to vector<1x256xf32>
    %283 = vector.shape_cast %250 : vector<1x256xf32> to vector<1x1x256xf32>
    tpu.vector_store %arg6[%c0_116, %c3_117, %c0_118], %283 {strides = array<i32>} : memref<1x4x256xf32, #tpu.memory_space<vmem>>, vector<1x1x256xf32>,
    %c0_119 = arith.constant 0 : index
    %c3_120 = arith.constant 3 : index
    %c0_121 = arith.constant 0 : index
    %284 = vector.load %arg7[%c0_119, %c3_120, %c0_121] : memref<1x4x256xf32, #tpu.memory_space<vmem>>, vector<1x1x256xf32>
    %285 = vector.shape_cast %284 : vector<1x1x256xf32> to vector<1x256xf32>
    %286 = vector.shape_cast %248 : vector<1x256xf32> to vector<1x1x256xf32>
    tpu.vector_store %arg7[%c0_119, %c3_120, %c0_121], %286 {strides = array<i32>} : memref<1x4x256xf32, #tpu.memory_space<vmem>>, vector<1x1x256xf32>,
    %c0_122 = arith.constant 0 : index
    %c3_123 = arith.constant 3 : index
    %c0_124 = arith.constant 0 : index
    %287 = vector.load %arg8[%c0_122, %c3_123, %c0_124] : memref<1x4x256xf32, #tpu.memory_space<vmem>>, vector<1x1x256xf32>
    %288 = vector.shape_cast %287 : vector<1x1x256xf32> to vector<1x256xf32>
    %289 = vector.shape_cast %266 : vector<1x256xf32> to vector<1x1x256xf32>
    tpu.vector_store %arg8[%c0_122, %c3_123, %c0_124], %289 {strides = array<i32>} : memref<1x4x256xf32, #tpu.memory_space<vmem>>, vector<1x1x256xf32>,
    %c0_125 = arith.constant 0 : index
    %c0_126 = arith.constant 0 : index
    %c0_127 = arith.constant 0 : index
    %290 = vector.load %arg4[%c0_125, %c0_126, %c0_127] : memref<1x4x8xf32, #tpu.memory_space<vmem>>, vector<1x4x8xf32>
    %291 = vector.shape_cast %290 : vector<1x4x8xf32> to vector<4x8xf32>
    %292 = arith.truncf %291 : vector<4x8xf32> to vector<4x8xbf16>
    %293 = arith.truncf %274 : vector<8x256xf32> to vector<8x256xbf16>
    %cst_128 = arith.constant dense<0.000000e+00> : vector<4x256xf32>
    %294 = tpu.matmul %292, %293, %cst_128 {dimension_numbers = #tpu.dot_dimension_numbers<[1], [0], [0], [1], [0, 0, 1, 1], [], []>} : vector<4x8xbf16>, vector<8x256xbf16>, vector<4x256xf32> -> vector<4x256xf32>
    %c0_129 = arith.constant 0 : index
    %c0_130 = arith.constant 0 : index
    %c0_131 = arith.constant 0 : index
    %295 = vector.load %arg9[%c0_129, %c0_130, %c0_131] : memref<1x4x256xf32, #tpu.memory_space<vmem>>, vector<1x4x256xf32>
    %296 = vector.shape_cast %295 : vector<1x4x256xf32> to vector<4x256xf32>
    %297 = vector.shape_cast %294 : vector<4x256xf32> to vector<1x4x256xf32>
    tpu.vector_store %arg9[%c0_129, %c0_130, %c0_131], %297 {strides = array<i32>} : memref<1x4x256xf32, #tpu.memory_space<vmem>>, vector<1x4x256xf32>,
    %cst_132 = arith.constant 9.99999971E-10 : f32
    %298 = vector.broadcast %cst_132 : f32 to vector<1x256xf32>
    %299 = arith.maximumf %275, %298 : vector<1x256xf32>
    %300 = arith.divf %277, %299 : vector<1x256xf32>
    %c0_133 = arith.constant 0 : index
    %c0_134 = arith.constant 0 : index
    %c0_135 = arith.constant 0 : index
    %301 = vector.load %arg10[%c0_133, %c0_134, %c0_135] : memref<1x1x256xf32, #tpu.memory_space<vmem>>, vector<1x1x256xf32>
    %302 = vector.shape_cast %301 : vector<1x1x256xf32> to vector<1x256xf32>
    %303 = vector.shape_cast %300 : vector<1x256xf32> to vector<1x1x256xf32>
    tpu.vector_store %arg10[%c0_133, %c0_134, %c0_135], %303 {strides = array<i32>} : memref<1x1x256xf32, #tpu.memory_space<vmem>>, vector<1x1x256xf32>,
    return
  }
  func.func @transform_0(%arg0: i32, %arg1: i32) -> (i32, i32) {
    %c0_i32 = arith.constant 0 : i32
    %c0_i32_0 = arith.constant 0 : i32
    return %c0_i32, %arg1 : i32, i32
  }
  func.func @transform_1(%arg0: i32, %arg1: i32) -> (i32, i32, i32) {
    %c0_i32 = arith.constant 0 : i32
    %c0_i32_0 = arith.constant 0 : i32
    %c0_i32_1 = arith.constant 0 : i32
    return %arg0, %c0_i32, %c0_i32_0 : i32, i32, i32
  }
  func.func @transform_2(%arg0: i32, %arg1: i32) -> (i32, i32, i32) {
    %c0_i32 = arith.constant 0 : i32
    %c0_i32_0 = arith.constant 0 : i32
    %c0_i32_1 = arith.constant 0 : i32
    return %arg0, %c0_i32, %c0_i32_0 : i32, i32, i32
  }
  func.func @transform_3(%arg0: i32, %arg1: i32) -> (i32, i32, i32) {
    %c0_i32 = arith.constant 0 : i32
    %c0_i32_0 = arith.constant 0 : i32
    return %arg0, %c0_i32, %arg1 : i32, i32, i32
  }
  func.func @transform_4(%arg0: i32, %arg1: i32) -> (i32, i32, i32) {
    %c0_i32 = arith.constant 0 : i32
    %c0_i32_0 = arith.constant 0 : i32
    return %arg0, %c0_i32, %arg1 : i32, i32, i32
  }
  func.func @transform_5(%arg0: i32, %arg1: i32) -> (i32, i32, i32) {
    %c0_i32 = arith.constant 0 : i32
    %c0_i32_0 = arith.constant 0 : i32
    return %arg0, %c0_i32, %arg1 : i32, i32, i32
  }
  func.func @transform_6(%arg0: i32, %arg1: i32) -> (i32, i32, i32) {
    %c0_i32 = arith.constant 0 : i32
    %c0_i32_0 = arith.constant 0 : i32
    return %arg0, %c0_i32, %arg1 : i32, i32, i32
  }
  func.func @transform_7(%arg0: i32, %arg1: i32) -> (i32, i32, i32) {
    %c0_i32 = arith.constant 0 : i32
    %c0_i32_0 = arith.constant 0 : i32
    return %arg0, %c0_i32, %arg1 : i32, i32, i32
  }
  func.func @transform_8(%arg0: i32, %arg1: i32) -> (i32, i32, i32) {
    %c0_i32 = arith.constant 0 : i32
    %c0_i32_0 = arith.constant 0 : i32
    return %arg0, %c0_i32, %arg1 : i32, i32, i32
  }
}

</mosaic_0001>

<llo_original>
// kernel: tpu_custom_call.1
$region0: #{tpu_custom_call.1}
  #allocation0 [shape = 'u32[]', space=smem, size = 0x4, offset = 0x4, fixed_abs, tag = 'smem constant byte address 0x4 - core index']
  #allocation1 [shape = 'u32[144,128]{1,0:T(1,128)}', space=vmem, size = 0x12000, scoped, tag = 'internal scratch']
  %s0 = inlined_call_operand.vmem [shape: f32[2,256], index: 0, kind: input, shape index: {}]
  %s1 = inlined_call_operand.vmem [shape: f32[2,8,3], index: 1, kind: input, shape index: {}]
  %s2 = inlined_call_operand.vmem [shape: f32[2,4,8], index: 2, kind: input, shape index: {}]
  %s3 = inlined_call_operand.hbm [shape: s32[2,4,256], index: 3, kind: output, shape index: {0}]
  %s4 = inlined_call_operand.hbm [shape: f32[2,4,256], index: 4, kind: output, shape index: {1}]
  %s5 = inlined_call_operand.hbm [shape: f32[2,4,256], index: 5, kind: output, shape index: {2}]
  %s6 = inlined_call_operand.hbm [shape: f32[2,4,256], index: 6, kind: output, shape index: {3}]
  %s7 = inlined_call_operand.hbm [shape: f32[2,4,256], index: 7, kind: output, shape index: {4}]
  %s8 = inlined_call_operand.hbm [shape: f32[2,1,256], index: 8, kind: output, shape index: {5}]
  %9 = xla_tuple %s3, %s4, %s5, %s6, %s7, %s8
  %s10 = sld [smem:[#allocation0]]
  $region85: #{tpu_custom_call.1} parent=0
    _
  %s12 = ssub.s32 1, %s10
  %s13 = scalar_select 0, %s12, %s10
  $region1: #{tpu_custom_call.1} parent=0
    #allocation2 [shape = 'u8[8192]{0}', space=vmem, size = 0x2000, scoped, tag = 'output window, operand 0']
    #allocation3 [shape = 's32[2]{0}', space=sflag, size = 0x8, scoped, tag = 'scoped memory for tpu_custom_call.1']
    #allocation4 [shape = 'u8[8192]{0}', space=vmem, size = 0x2000, scoped, tag = 'output window, operand 1']
    #allocation5 [shape = 's32[2]{0}', space=sflag, size = 0x8, scoped, tag = 'scoped memory for tpu_custom_call.1']
    #allocation6 [shape = 'u8[8192]{0}', space=vmem, size = 0x2000, scoped, tag = 'output window, operand 2']
    #allocation7 [shape = 'u8[8192]{0}', space=vmem, size = 0x2000, scoped, tag = 'output window, operand 3']
    #allocation8 [shape = 's32[2]{0}', space=sflag, size = 0x8, scoped, tag = 'scoped memory for tpu_custom_call.1']
    #allocation9 [shape = 'u8[8192]{0}', space=vmem, size = 0x2000, scoped, tag = 'output window, operand 4']
    #allocation10 [shape = 'u8[2048]{0}', space=vmem, size = 0x800, scoped, tag = 'output window, operand 5']
    #allocation11 [shape = 's32[2]{0}', space=sflag, size = 0x8, scoped, tag = 'scoped memory for tpu_custom_call.1']
    %14 = vsyncpa [#allocation3], 0
    %s15 = scalar_lea.sflag [#allocation3], 1
    %16 = vsyncpa %s15, 0
    %17 = vsyncpa [#allocation5], 0
    %s18 = scalar_lea.sflag [#allocation5], 1
    %19 = vsyncpa %s18, 0
    %20 = vsyncpa [#allocation8], 0
    %s21 = scalar_lea.sflag [#allocation8], 1
    %22 = vsyncpa %s21, 0
    %23 = vsyncpa [#allocation11], 0
    %s24 = scalar_lea.sflag [#allocation11], 1
    %25 = vsyncpa %s24, 0
    loop: start=0, step=1, limit=4
    $region2: #{tpu_custom_call.1} parent=1 // loop_pre_header
      _
    $region3: #{tpu_custom_call.1} parent=1 // loop_header
      %s27 = sphi 0, %s31
      %p28 = scmp.ge.s32.totalorder %s27, 4
      %s34 = sphi 0, %s46
      %s35 = sphi 0, %s42
      %s36 = sphi 0, %s34
      %s37 = sphi 0, %s35
      %s38 = sphi 0, %s36
      %s39 = sphi 0, %s37
      %s49 = sphi 0, %s51
      %s52 = sphi 0, %s49
      %s53 = sphi 0, %s52
      %s69 = sphi 0, %s53
      %s75 = sphi 0, %s77
      %s78 = sphi 0, %s75
      %s79 = sphi 0, %s78
      %s95 = sphi 0, %s79
      %s101 = sphi 0, %s103
      %s104 = sphi 0, %s101
      %s105 = sphi 0, %s104
      %s121 = sphi 0, %s105
      %s129 = sphi 0, %s131
      %s132 = sphi 0, %s129
      %s133 = sphi 0, %s132
      %s149 = sphi 0, %s133
      %s157 = sphi 0, %s159
      %s160 = sphi 0, %s157
      %s161 = sphi 0, %s160
      %s177 = sphi 0, %s161
      %s185 = sphi 0, %s187
      %s188 = sphi 0, %s185
      %s189 = sphi 0, %s188
      %s205 = sphi 0, %s189
      %s213 = sphi 0, %s215
      %s216 = sphi 0, %s213
      %s217 = sphi 0, %s216
      %s233 = sphi 0, %s217
      %s241 = sphi 0, %s243
      %s244 = sphi 0, %s241
      %s245 = sphi 0, %s244
      %s261 = sphi 0, %s245
      %s269 = sphi 0, %s271
      %s272 = sphi 0, %s269
      %s273 = sphi 0, %s272
      %s289 = sphi 0, %s273
    $region4: #{tpu_custom_call.1} parent=1 // loop_header_branch
      %30 = sbr.rel (%p28) target = $region8
    $region5: #{tpu_custom_call.1} parent=1 // loop_body
      %s32 = ssub.s32 %s27, 1
      %s33 = ssub.s32 %s27, 2
      %s40 = sadd.s32 1, %s35
      %p41 = scmp.ge.s32.totalorder %s40, 1
      %s42 = scalar_select %p41, 0, %s40
      %s43 = sadd.s32 1, %s34
      %s44 = scalar_select %p41, %s43, %s34
      %p45 = scmp.ge.s32.totalorder %s44, 2
      %s46 = scalar_select %p45, 0, %s44
      %s47 = ssub.s32 %s35, %s42
      %p48 = scmp.eq.s32.totalorder %s47, 0
      %s50 = sadd.s32 %s49, 1
      %s51 = scalar_select %p48, %s49, %s50
      %p54 = pneg %p48
      %p55 = scmp.eq.s32.totalorder %s27, 1
      %p56 = por %p54, %p55
      %p57 = scmp.ne.s32.totalorder %s49, %s52
      %p58 = scmp.eq.s32.totalorder %s27, 0
      %p59 = por %p57, %p58
      %p60 = scmp.ne.s32.totalorder %s49, %s52
      %p61 = scmp.eq.s32.totalorder %s32, 1
      %p62 = por %p60, %p61
      %p63 = scmp.ne.s32.totalorder %s52, %s53
      %p64 = scmp.eq.s32.totalorder %s32, 0
      %p65 = por %p63, %p64
      %p66 = scmp.ne.s32.totalorder %s52, %s53
      %p67 = scmp.eq.s32.totalorder %s33, 1
      %p68 = por %p66, %p67
      %p70 = scmp.ne.s32.totalorder %s53, %s69
      %p71 = scmp.eq.s32.totalorder %s33, 0
      %p72 = por %p70, %p71
      %s73 = ssub.s32 %s34, %s46
      %p74 = scmp.eq.s32.totalorder %s73, 0
      %s76 = sadd.s32 %s75, 1
      %s77 = scalar_select %p74, %s75, %s76
      %p80 = pneg %p74
      %p81 = scmp.eq.s32.totalorder %s27, 1
      %p82 = por %p80, %p81
      %p83 = scmp.ne.s32.totalorder %s75, %s78
      %p84 = scmp.eq.s32.totalorder %s27, 0
      %p85 = por %p83, %p84
      %p86 = scmp.ne.s32.totalorder %s75, %s78
      %p87 = scmp.eq.s32.totalorder %s32, 1
      %p88 = por %p86, %p87
      %p89 = scmp.ne.s32.totalorder %s78, %s79
      %p90 = scmp.eq.s32.totalorder %s32, 0
      %p91 = por %p89, %p90
      %p92 = scmp.ne.s32.totalorder %s78, %s79
      %p93 = scmp.eq.s32.totalorder %s33, 1
      %p94 = por %p92, %p93
      %p96 = scmp.ne.s32.totalorder %s79, %s95
      %p97 = scmp.eq.s32.totalorder %s33, 0
      %p98 = por %p96, %p97
      %s99 = ssub.s32 %s34, %s46
      %p100 = scmp.eq.s32.totalorder %s99, 0
      %s102 = sadd.s32 %s101, 1
      %s103 = scalar_select %p100, %s101, %s102
      %p106 = pneg %p100
      %p107 = scmp.eq.s32.totalorder %s27, 1
      %p108 = por %p106, %p107
      %p109 = scmp.ne.s32.totalorder %s101, %s104
      %p110 = scmp.eq.s32.totalorder %s27, 0
      %p111 = por %p109, %p110
      %p112 = scmp.ne.s32.totalorder %s101, %s104
      %p113 = scmp.eq.s32.totalorder %s32, 1
      %p114 = por %p112, %p113
      %p115 = scmp.ne.s32.totalorder %s104, %s105
      %p116 = scmp.eq.s32.totalorder %s32, 0
      %p117 = por %p115, %p116
      %p118 = scmp.ne.s32.totalorder %s104, %s105
      %p119 = scmp.eq.s32.totalorder %s33, 1
      %p120 = por %p118, %p119
      %p122 = scmp.ne.s32.totalorder %s105, %s121
      %p123 = scmp.eq.s32.totalorder %s33, 0
      %p124 = por %p122, %p123
      %s125 = ssub.s32 %s34, %s46
      %s126 = ssub.s32 %s35, %s42
      %s127 = sor.u32 %s125, %s126
      %p128 = scmp.eq.s32.totalorder %s127, 0
      %s130 = sadd.s32 %s129, 1
      %s131 = scalar_select %p128, %s129, %s130
      %p134 = pneg %p128
      %p135 = scmp.eq.s32.totalorder %s27, 1
      %p136 = por %p134, %p135
      %p137 = scmp.ne.s32.totalorder %s129, %s132
      %p138 = scmp.eq.s32.totalorder %s27, 0
      %p139 = por %p137, %p138
      %p140 = scmp.ne.s32.totalorder %s129, %s132
      %p141 = scmp.eq.s32.totalorder %s32, 1
      %p142 = por %p140, %p141
      %p143 = scmp.ne.s32.totalorder %s132, %s133
      %p144 = scmp.eq.s32.totalorder %s32, 0
      %p145 = por %p143, %p144
      %p146 = scmp.ne.s32.totalorder %s132, %s133
      %p147 = scmp.eq.s32.totalorder %s33, 1
      %p148 = por %p146, %p147
      %p150 = scmp.ne.s32.totalorder %s133, %s149
      %p151 = scmp.eq.s32.totalorder %s33, 0
      %p152 = por %p150, %p151
      %s153 = ssub.s32 %s34, %s46
      %s154 = ssub.s32 %s35, %s42
      %s155 = sor.u32 %s153, %s154
      %p156 = scmp.eq.s32.totalorder %s155, 0
      %s158 = sadd.s32 %s157, 1
      %s159 = scalar_select %p156, %s157, %s158
      %p162 = pneg %p156
      %p163 = scmp.eq.s32.totalorder %s27, 1
      %p164 = por %p162, %p163
      %p165 = scmp.ne.s32.totalorder %s157, %s160
      %p166 = scmp.eq.s32.totalorder %s27, 0
      %p167 = por %p165, %p166
      %p168 = scmp.ne.s32.totalorder %s157, %s160
      %p169 = scmp.eq.s32.totalorder %s32, 1
      %p170 = por %p168, %p169
      %p171 = scmp.ne.s32.totalorder %s160, %s161
      %p172 = scmp.eq.s32.totalorder %s32, 0
      %p173 = por %p171, %p172
      %p174 = scmp.ne.s32.totalorder %s160, %s161
      %p175 = scmp.eq.s32.totalorder %s33, 1
      %p176 = por %p174, %p175
      %p178 = scmp.ne.s32.totalorder %s161, %s177
      %p179 = scmp.eq.s32.totalorder %s33, 0
      %p180 = por %p178, %p179
      %s181 = ssub.s32 %s34, %s46
      %s182 = ssub.s32 %s35, %s42
      %s183 = sor.u32 %s181, %s182
      %p184 = scmp.eq.s32.totalorder %s183, 0
      %s186 = sadd.s32 %s185, 1
      %s187 = scalar_select %p184, %s185, %s186
      %p190 = pneg %p184
      %p191 = scmp.eq.s32.totalorder %s27, 1
      %p192 = por %p190, %p191
      %p193 = scmp.ne.s32.totalorder %s185, %s188
      %p194 = scmp.eq.s32.totalorder %s27, 0
      %p195 = por %p193, %p194
      %p196 = scmp.ne.s32.totalorder %s185, %s188
      %p197 = scmp.eq.s32.totalorder %s32, 1
      %p198 = por %p196, %p197
      %p199 = scmp.ne.s32.totalorder %s188, %s189
      %p200 = scmp.eq.s32.totalorder %s32, 0
      %p201 = por %p199, %p200
      %p202 = scmp.ne.s32.totalorder %s188, %s189
      %p203 = scmp.eq.s32.totalorder %s33, 1
      %p204 = por %p202, %p203
      %p206 = scmp.ne.s32.totalorder %s189, %s205
      %p207 = scmp.eq.s32.totalorder %s33, 0
      %p208 = por %p206, %p207
      %s209 = ssub.s32 %s34, %s46
      %s210 = ssub.s32 %s35, %s42
      %s211 = sor.u32 %s209, %s210
      %p212 = scmp.eq.s32.totalorder %s211, 0
      %s214 = sadd.s32 %s213, 1
      %s215 = scalar_select %p212, %s213, %s214
      %p218 = pneg %p212
      %p219 = scmp.eq.s32.totalorder %s27, 1
      %p220 = por %p218, %p219
      %p221 = scmp.ne.s32.totalorder %s213, %s216
      %p222 = scmp.eq.s32.totalorder %s27, 0
      %p223 = por %p221, %p222
      %p224 = scmp.ne.s32.totalorder %s213, %s216
      %p225 = scmp.eq.s32.totalorder %s32, 1
      %p226 = por %p224, %p225
      %p227 = scmp.ne.s32.totalorder %s216, %s217
      %p228 = scmp.eq.s32.totalorder %s32, 0
      %p229 = por %p227, %p228
      %p230 = scmp.ne.s32.totalorder %s216, %s217
      %p231 = scmp.eq.s32.totalorder %s33, 1
      %p232 = por %p230, %p231
      %p234 = scmp.ne.s32.totalorder %s217, %s233
      %p235 = scmp.eq.s32.totalorder %s33, 0
      %p236 = por %p234, %p235
      %s237 = ssub.s32 %s34, %s46
      %s238 = ssub.s32 %s35, %s42
      %s239 = sor.u32 %s237, %s238
      %p240 = scmp.eq.s32.totalorder %s239, 0
      %s242 = sadd.s32 %s241, 1
      %s243 = scalar_select %p240, %s241, %s242
      %p246 = pneg %p240
      %p247 = scmp.eq.s32.totalorder %s27, 1
      %p248 = por %p246, %p247
      %p249 = scmp.ne.s32.totalorder %s241, %s244
      %p250 = scmp.eq.s32.totalorder %s27, 0
      %p251 = por %p249, %p250
      %p252 = scmp.ne.s32.totalorder %s241, %s244
      %p253 = scmp.eq.s32.totalorder %s32, 1
      %p254 = por %p252, %p253
      %p255 = scmp.ne.s32.totalorder %s244, %s245
      %p256 = scmp.eq.s32.totalorder %s32, 0
      %p257 = por %p255, %p256
      %p258 = scmp.ne.s32.totalorder %s244, %s245
      %p259 = scmp.eq.s32.totalorder %s33, 1
      %p260 = por %p258, %p259
      %p262 = scmp.ne.s32.totalorder %s245, %s261
      %p263 = scmp.eq.s32.totalorder %s33, 0
      %p264 = por %p262, %p263
      %s265 = ssub.s32 %s34, %s46
      %s266 = ssub.s32 %s35, %s42
      %s267 = sor.u32 %s265, %s266
      %p268 = scmp.eq.s32.totalorder %s267, 0
      %s270 = sadd.s32 %s269, 1
      %s271 = scalar_select %p268, %s269, %s270
      %p274 = pneg %p268
      %p275 = scmp.eq.s32.totalorder %s27, 1
      %p276 = por %p274, %p275
      %p277 = scmp.ne.s32.totalorder %s269, %s272
      %p278 = scmp.eq.s32.totalorder %s27, 0
      %p279 = por %p277, %p278
      %p280 = scmp.ne.s32.totalorder %s269, %s272
      %p281 = scmp.eq.s32.totalorder %s32, 1
      %p282 = por %p280, %p281
      %p283 = scmp.ne.s32.totalorder %s272, %s273
      %p284 = scmp.eq.s32.totalorder %s32, 0
      %p285 = por %p283, %p284
      %p286 = scmp.ne.s32.totalorder %s272, %s273
      %p287 = scmp.eq.s32.totalorder %s33, 1
      %p288 = por %p286, %p287
      %p290 = scmp.ne.s32.totalorder %s273, %s289
      %p291 = scmp.eq.s32.totalorder %s33, 0
      %p292 = por %p290, %p291
      %p293 = scmp.le.s32.totalorder 1, %s27
      %p294 = scmp.lt.s32.totalorder %s27, 3
      %p295 = pnand %p293, %p294
      %p296 = pneg %p295
      // Predicated region
      $region9: #{tpu_custom_call.1} parent=5 // pred_check
        _
      $region10: #{tpu_custom_call.1} parent=5 // pred_check_branch
        %298 = sbr.rel (%p295) target = $region12
      $region11: #{tpu_custom_call.1} parent=5 // pred_region
        %s299 = ssub.s32 %s27, 1
        // Predicated region
        $region13: #{tpu_custom_call.1} parent=11 // pred_check
          %p300 = pneg %p65
        $region14: #{tpu_custom_call.1} parent=11 // pred_check_branch
          %302 = sbr.rel (%p300) target = $region16
        $region15: #{tpu_custom_call.1} parent=11 // pred_region
          %s303 = smul.u32 2, %s37
          %p304 = scmp.lt.s32.totalorder %s303, 1
          %s305 = scalar_select %p304, %s303, 1
          %s306 = smul.addr %s305, 2
          %s307 = scalar_lea.vmem %s0, %s306
          %s308 = smul.u32 2, %s37
        $region16: #{tpu_custom_call.1} parent=11 // pred_fallthru
          _
      $region12: #{tpu_custom_call.1} parent=5 // pred_fallthru
        _
      %p309 = scmp.lt.s32.totalorder %s27, 2
      // Predicated region
      $region17: #{tpu_custom_call.1} parent=5 // pred_check
        %p310 = pneg %p309
      $region18: #{tpu_custom_call.1} parent=5 // pred_check_branch
        %312 = sbr.rel (%p310) target = $region20
      $region19: #{tpu_custom_call.1} parent=5 // pred_region
        // Predicated region
        $region21: #{tpu_custom_call.1} parent=19 // pred_check
          %p313 = pneg %p85
        $region22: #{tpu_custom_call.1} parent=19 // pred_check_branch
          %315 = sbr.rel (%p313) target = $region24
        $region23: #{tpu_custom_call.1} parent=19 // pred_region
          %p316 = scmp.lt.s32.totalorder %s34, 1
          %s317 = scalar_select %p316, %s34, 1
          %s318 = smul.addr %s317, 8
          %s319 = scalar_lea.vmem %s1, %s318
        $region24: #{tpu_custom_call.1} parent=19 // pred_fallthru
          _
        // Predicated region
        $region25: #{tpu_custom_call.1} parent=19 // pred_check
          %p320 = pneg %p111
        $region26: #{tpu_custom_call.1} parent=19 // pred_check_branch
          %322 = sbr.rel (%p320) target = $region28
        $region27: #{tpu_custom_call.1} parent=19 // pred_region
          %p323 = scmp.lt.s32.totalorder %s34, 1
          %s324 = scalar_select %p323, %s34, 1
          %s325 = smul.addr %s324, 4
          %s326 = scalar_lea.vmem %s2, %s325
        $region28: #{tpu_custom_call.1} parent=19 // pred_fallthru
          _
      $region20: #{tpu_custom_call.1} parent=5 // pred_fallthru
        _
      %p327 = scmp.le.s32.totalorder 1, %s27
      %p328 = scmp.lt.s32.totalorder %s27, 3
      %p329 = pnand %p327, %p328
      %p330 = pneg %p329
      // Predicated region
      $region29: #{tpu_custom_call.1} parent=5 // pred_check
        _
      $region30: #{tpu_custom_call.1} parent=5 // pred_check_branch
        %332 = sbr.rel (%p329) target = $region32
      $region31: #{tpu_custom_call.1} parent=5 // pred_region
        %s333 = ssub.s32 %s27, 1
        %s334 = smul.u32 2, %s37
        %p335 = scmp.lt.s32.totalorder %s334, 1
        %s336 = scalar_select %p335, %s334, 1
        %s337 = smul.addr %s336, 2
        %s338 = scalar_lea.vmem %s0, %s337
        %p339 = pneg %p65
        %p340 = pneg %p62
        %p341 = scmp.lt.s32.totalorder %s36, 1
        %s342 = scalar_select %p341, %s36, 1
        %s343 = smul.addr %s342, 8
        %s344 = scalar_lea.vmem %s1, %s343
        %p345 = pneg %p91
        %p346 = pneg %p88
        %p347 = scmp.lt.s32.totalorder %s36, 1
        %s348 = scalar_select %p347, %s36, 1
        %s349 = smul.addr %s348, 4
        %s350 = scalar_lea.vmem %s2, %s349
        %p351 = pneg %p117
        %p352 = pneg %p114
        %p353 = pneg %p145
        %p354 = pneg %p142
        %s355 = sand.u32 %s132, 1
        %s356 = scalar_lea.sflag [#allocation3], %s355
        %s357 = sand.u32 %s132, 1
        %s358 = smul.addr %s357, 8
        %s359 = scalar_lea.vmem [#allocation2], %s358
        %p360 = pneg %p173
        %p361 = pneg %p170
        %s362 = sand.u32 %s32, 1
        %s363 = scalar_lea.sflag [#allocation5], %s362
        %s364 = sand.u32 %s160, 1
        %s365 = smul.addr %s364, 8
        %s366 = scalar_lea.vmem [#allocation4], %s365
        %p367 = pneg %p201
        %p368 = pneg %p198
        %s369 = sand.u32 %s32, 1
        %s370 = scalar_lea.sflag [#allocation5], %s369
        %s371 = sand.u32 %s188, 1
        %s372 = smul.addr %s371, 8
        %s373 = scalar_lea.vmem [#allocation6], %s372
        %p374 = pneg %p229
        %p375 = pneg %p226
        %s376 = sand.u32 %s32, 1
        %s377 = scalar_lea.sflag [#allocation8], %s376
        %s378 = sand.u32 %s216, 1
        %s379 = smul.addr %s378, 8
        %s380 = scalar_lea.vmem [#allocation7], %s379
        %p381 = pneg %p257
        %p382 = pneg %p254
        %s383 = sand.u32 %s32, 1
        %s384 = scalar_lea.sflag [#allocation8], %s383
        %s385 = sand.u32 %s244, 1
        %s386 = smul.addr %s385, 8
        %s387 = scalar_lea.vmem [#allocation9], %s386
        %p388 = pneg %p285
        %p389 = pneg %p282
        %s390 = sand.u32 %s272, 1
        %s391 = scalar_lea.sflag [#allocation11], %s390
        %s392 = sand.u32 %s272, 1
        %s393 = smul.addr %s392, 2
        %s394 = scalar_lea.vmem [#allocation10], %s393
        %s395 = smul.u32 2, %s37
        %p396 = scmp.lt.s32.totalorder %s395, 1
        %s397 = scalar_select %p396, %s395, 1
        %s398 = smul.addr %s397, 2
        %s399 = scalar_lea.vmem %s0, %s398
        %s400 = smul.u32 2, %s37
        %p401 = scmp.lt.s32.totalorder %s36, 1
        %s402 = scalar_select %p401, %s36, 1
        %s403 = smul.addr %s402, 8
        %s404 = scalar_lea.vmem %s1, %s403
        %p405 = scmp.lt.s32.totalorder %s36, 1
        %s406 = scalar_select %p405, %s36, 1
        %s407 = smul.addr %s406, 4
        %s408 = scalar_lea.vmem %s2, %s407
        %s409 = smul.u32 2, %s37
        %s410 = smul.u32 2, %s37
        %s411 = smul.u32 2, %s37
        %s412 = smul.u32 2, %s37
        %s413 = smul.u32 2, %s37
        %s414 = smul.u32 2, %s37
        %v416 = vld [vmem:[%s404] sm:$0xff]
        %v417 = vld [vmem:[%s399] ss:$2 sm:$0x3]
        %s418 = scalar_lea.vmem %s399, 1
        %v419 = vld [vmem:[%s418] ss:$2 sm:$0x3]
        %421 = vset.pattern.permute.xlu0 0
        %422 = vperm.xlu0 %421, %v416
        %v423 = vpop.permute.xlu0 %422
        %v426 = vlaneseq
        %v427 = vshrl.u32 %v426, 7
        %v428 = vsub.s32 0, %v427
        %v429 = vrot.slane %v417, %v428
        %v430 = vlaneseq
        %v431 = vshrl.u32 %v430, 7
        %v432 = vsub.s32 1, %v431
        %v433 = vrot.slane %v417, %v432
        %v436 = vsub.f32 %v423, %v429
        %v437 = vsub.f32 %v423, %v433
        %438 = vset.pattern.permute.xlu0 1
        %439 = vperm.xlu0 %438, %v416
        %v440 = vpop.permute.xlu0 %439
        %v443 = vlaneseq
        %v444 = vshrl.u32 %v443, 7
        %v445 = vsub.s32 0, %v444
        %v446 = vrot.slane %v419, %v445
        %v447 = vlaneseq
        %v448 = vshrl.u32 %v447, 7
        %v449 = vsub.s32 1, %v448
        %v450 = vrot.slane %v419, %v449
        %v453 = vsub.f32 %v440, %v446
        %v454 = vsub.f32 %v440, %v450
        %v455 = vmul.f32 %v436, %v436
        %v456 = vmul.f32 %v437, %v437
        %v457 = vmul.f32 %v453, %v453
        %v458 = vmul.f32 %v454, %v454
        %v459 = vadd.f32 %v455, %v457
        %v460 = vadd.f32 %v456, %v458
        %vm461 = vcmp.le.f32.partialorder %v459, 0.0625
        %vm462 = vcmp.le.f32.partialorder %v460, 0.0625
        %vm463 = vcmp.ge.f32.partialorder %v416, 0.0
        %v464 = vsel %vm463, 1, 0
        %465 = vset.pattern.permute.xlu0 2
        %466 = vperm.xlu0 %465, %v464
        %v467 = vpop.permute.xlu0 %466
        %vm468 = vcmp.eq.s32.totalorder %v467, 1
        %vm469 = vmand %vm461, %vm468
        %vm470 = vmand %vm462, %vm468
        %471 = vset.pattern.permute.xlu0 2
        %472 = vperm.xlu0 %471, %v416
        %v473 = vpop.permute.xlu0 %472
        %v475 = vsel %vm469, %v473, inf
        %v476 = vsel %vm470, %v473, inf
        %v477 = vlaneseq
        %v478 = vshrl.u32 %v477, 7
        %v479 = vrot.slane %v475, 4
        %v480 = vmin.f32 %v475, %v479
        %v481 = vrot.slane %v480, 2
        %v482 = vmin.f32 %v480, %v481
        %v483 = vrot.slane %v482, 1
        %v484 = vmin.f32 %v482, %v483
        %v485 = vrot.slane %v476, 4
        %v486 = vmin.f32 %v476, %v485
        %v487 = vrot.slane %v486, 2
        %v488 = vmin.f32 %v486, %v487
        %v489 = vrot.slane %v488, 1
        %v490 = vmin.f32 %v488, %v489
        %vm491 = vcmp.lt.f32.partialorder %v484, inf
        %vm492 = vcmp.lt.f32.partialorder %v490, inf
        %vm493 = vcmp.eq.f32.partialorder %v475, %v484
        %vm494 = vcmp.eq.f32.partialorder %v476, %v490
        %v495 = vsel %vm491, 1, 0
        %v496 = vsel %vm492, 1, 0
        %vm497 = vcmp.eq.s32.totalorder %v495, 1
        %vm498 = vcmp.eq.s32.totalorder %v496, 1
        %vm499 = vmand %vm493, %vm497
        %vm500 = vmand %vm494, %vm498
        %v501 = vsel %vm499, %v478, 8
        %v502 = vsel %vm500, %v478, 8
        %v503 = vrot.slane %v501, 4
        %vm504 = vcmp.lt.s32.totalorder %v501, %v503
        %v505 = vsel %vm504, %v501, %v503
        %v506 = vrot.slane %v505, 2
        %vm507 = vcmp.lt.s32.totalorder %v505, %v506
        %v508 = vsel %vm507, %v505, %v506
        %v509 = vrot.slane %v508, 1
        %vm510 = vcmp.lt.s32.totalorder %v508, %v509
        %v511 = vsel %vm510, %v508, %v509
        %v512 = vrot.slane %v502, 4
        %vm513 = vcmp.lt.s32.totalorder %v502, %v512
        %v514 = vsel %vm513, %v502, %v512
        %v515 = vrot.slane %v514, 2
        %vm516 = vcmp.lt.s32.totalorder %v514, %v515
        %v517 = vsel %vm516, %v514, %v515
        %v518 = vrot.slane %v517, 1
        %vm519 = vcmp.lt.s32.totalorder %v517, %v518
        %v520 = vsel %vm519, %v517, %v518
        %vm521 = vcmp.eq.s32.totalorder %v478, %v511
        %vm522 = vcmp.eq.s32.totalorder %v478, %v520
        %v523 = vsel %vm521, %v459, 0.0
        %v524 = vsel %vm522, %v460, 0.0
        %v525 = vrot.slane %v523, 4
        %v526 = vadd.f32 %v523, %v525
        %v527 = vrot.slane %v526, 2
        %v528 = vadd.f32 %v526, %v527
        %v529 = vrot.slane %v528, 1
        %v530 = vadd.f32 %v528, %v529
        %v531 = vrot.slane %v524, 4
        %v532 = vadd.f32 %v524, %v531
        %v533 = vrot.slane %v532, 2
        %v534 = vadd.f32 %v532, %v533
        %v535 = vrot.slane %v534, 1
        %v536 = vadd.f32 %v534, %v535
        %v537 = vsel %vm491, %v530, -1.0
        %v538 = vsel %vm492, %v536, -1.0
        %v539 = vsel %vm491, %v484, -1.0
        %v540 = vsel %vm492, %v490, -1.0
        %s541 = smul.u32 %s36, 8
        %v542 = vstv %s541
        %v543 = vadd.s32 %v542, %v511
        %v544 = vadd.s32 %v542, %v520
        %v545 = vsel %vm491, %v543, 4294967295
        %v546 = vsel %vm492, %v544, 4294967295
        %v547 = vmul.f32 %v537, 16.0
        %v548 = vmul.f32 %v538, 16.0
        %v549 = vmax.f32 %v547, 0.0
        %v550 = vmax.f32 %v548, 0.0
        %v551 = vsub.f32 0.0, %v549
        %v552 = vsub.f32 0.0, %v550
        %v553 = vmul.f32 %v551, 1.442695
        %v554 = vpow.pop %v553
        %v555 = vmul.f32 %v552, 1.442695
        %v556 = vpow.pop %v555
        %v557 = vmax.f32 %v554, 0.0
        %v558 = vmax.f32 %v556, 0.0
        %v559 = vmin.f32 %v557, 0.99
        %v560 = vmin.f32 %v558, 0.99
        %v561 = vsel %vm491, %v559, 0.0
        %v562 = vsel %vm492, %v560, 0.0
        %v563 = vsub.f32 1.0, %v561
        %v564 = vsub.f32 1.0, %v562
        %v565 = vsel %vm521, 1, 0
        %v566 = vsel %vm522, 1, 0
        %v567 = vcvt.s32.f32 %v565
        %v568 = vcvt.s32.f32 %v566
        %v569 = vmul.f32 %v561, %v567
        %v570 = vmul.f32 %v562, %v568
        %v571 = vadd.f32 %v569, 0.0
        %v572 = vadd.f32 %v570, 0.0
        %v573 = vadd.f32 %v561, 0.0
        %v574 = vadd.f32 %v562, 0.0
        %v575 = vmul.f32 %v539, %v561
        %v576 = vmul.f32 %v540, %v562
        %v577 = vadd.f32 %v575, 0.0
        %v578 = vadd.f32 %v576, 0.0
        %v579 = vcombine.low %v545, %v546
        %v581 = vunpack.c.l.s4 1966171168
        %v582 = vunpack.c.0.s8 %v581
        %v583 = vlaneseq
        %v584 = vshrl.u32 %v583, 7
        %v585 = vsub.s32 %v582, %v584
        %v586 = vrot.slane %v579, %v585
        %v588 = vunpack.c.l.s4 1966171168
        %v589 = vunpack.c.0.s8 %v588
        %v590 = vlaneseq
        %v591 = vshrl.u32 %v590, 7
        %v592 = vsub.s32 %v589, %v591
        %v593 = vrot.slane %v586, %v592
        %v594 = vlaneseq
        %vm595 = vcmp.ge.s32.totalorder %v594, 0
        %vm596 = vcmp.lt.s32.totalorder %v594, 256
        %vm597 = vmand %vm595, %vm596
        %598 = vst.msk [vmem:[%s359] ss:$4 sm:$0x3] %vm597, %v593
        %v601 = vcombine.low %v539, %v540
        %v603 = vunpack.c.l.s4 1966171168
        %v604 = vunpack.c.0.s8 %v603
        %v605 = vlaneseq
        %v606 = vshrl.u32 %v605, 7
        %v607 = vsub.s32 %v604, %v606
        %v608 = vrot.slane %v601, %v607
        %v610 = vunpack.c.l.s4 1966171168
        %v611 = vunpack.c.0.s8 %v610
        %v612 = vlaneseq
        %v613 = vshrl.u32 %v612, 7
        %v614 = vsub.s32 %v611, %v613
        %v615 = vrot.slane %v608, %v614
        %617 = vst.msk [vmem:[%s366] ss:$4 sm:$0x3] %vm597, %v615
        %v620 = vcombine.low %v537, %v538
        %v622 = vunpack.c.l.s4 1966171168
        %v623 = vunpack.c.0.s8 %v622
        %v624 = vlaneseq
        %v625 = vshrl.u32 %v624, 7
        %v626 = vsub.s32 %v623, %v625
        %v627 = vrot.slane %v620, %v626
        %v629 = vunpack.c.l.s4 1966171168
        %v630 = vunpack.c.0.s8 %v629
        %v631 = vlaneseq
        %v632 = vshrl.u32 %v631, 7
        %v633 = vsub.s32 %v630, %v632
        %v634 = vrot.slane %v627, %v633
        %636 = vst.msk [vmem:[%s373] ss:$4 sm:$0x3] %vm597, %v634
        %v639 = vcombine.low %v559, %v560
        %v641 = vunpack.c.l.s4 1966171168
        %v642 = vunpack.c.0.s8 %v641
        %v643 = vlaneseq
        %v644 = vshrl.u32 %v643, 7
        %v645 = vsub.s32 %v642, %v644
        %v646 = vrot.slane %v639, %v645
        %v648 = vunpack.c.l.s4 1966171168
        %v649 = vunpack.c.0.s8 %v648
        %v650 = vlaneseq
        %v651 = vshrl.u32 %v650, 7
        %v652 = vsub.s32 %v649, %v651
        %v653 = vrot.slane %v646, %v652
        %655 = vst.msk [vmem:[%s380] ss:$4 sm:$0x3] %vm597, %v653
        %v656 = vsel %vm521, inf, %v475
        %v657 = vsel %vm522, inf, %v476
        %v658 = vrot.slane %v656, 4
        %v659 = vmin.f32 %v656, %v658
        %v660 = vrot.slane %v659, 2
        %v661 = vmin.f32 %v659, %v660
        %v662 = vrot.slane %v661, 1
        %v663 = vmin.f32 %v661, %v662
        %v664 = vrot.slane %v657, 4
        %v665 = vmin.f32 %v657, %v664
        %v666 = vrot.slane %v665, 2
        %v667 = vmin.f32 %v665, %v666
        %v668 = vrot.slane %v667, 1
        %v669 = vmin.f32 %v667, %v668
        %vm670 = vcmp.lt.f32.partialorder %v663, inf
        %vm671 = vcmp.lt.f32.partialorder %v669, inf
        %vm672 = vcmp.eq.f32.partialorder %v656, %v663
        %vm673 = vcmp.eq.f32.partialorder %v657, %v669
        %v674 = vsel %vm670, 1, 0
        %v675 = vsel %vm671, 1, 0
        %vm676 = vcmp.eq.s32.totalorder %v674, 1
        %vm677 = vcmp.eq.s32.totalorder %v675, 1
        %vm678 = vmand %vm672, %vm676
        %vm679 = vmand %vm673, %vm677
        %v680 = vsel %vm678, %v478, 8
        %v681 = vsel %vm679, %v478, 8
        %v682 = vrot.slane %v680, 4
        %vm683 = vcmp.lt.s32.totalorder %v680, %v682
        %v684 = vsel %vm683, %v680, %v682
        %v685 = vrot.slane %v684, 2
        %vm686 = vcmp.lt.s32.totalorder %v684, %v685
        %v687 = vsel %vm686, %v684, %v685
        %v688 = vrot.slane %v687, 1
        %vm689 = vcmp.lt.s32.totalorder %v687, %v688
        %v690 = vsel %vm689, %v687, %v688
        %v691 = vrot.slane %v681, 4
        %vm692 = vcmp.lt.s32.totalorder %v681, %v691
        %v693 = vsel %vm692, %v681, %v691
        %v694 = vrot.slane %v693, 2
        %vm695 = vcmp.lt.s32.totalorder %v693, %v694
        %v696 = vsel %vm695, %v693, %v694
        %v697 = vrot.slane %v696, 1
        %vm698 = vcmp.lt.s32.totalorder %v696, %v697
        %v699 = vsel %vm698, %v696, %v697
        %vm700 = vcmp.eq.s32.totalorder %v478, %v690
        %vm701 = vcmp.eq.s32.totalorder %v478, %v699
        %v702 = vsel %vm700, %v459, 0.0
        %v703 = vsel %vm701, %v460, 0.0
        %v704 = vrot.slane %v702, 4
        %v705 = vadd.f32 %v702, %v704
        %v706 = vrot.slane %v705, 2
        %v707 = vadd.f32 %v705, %v706
        %v708 = vrot.slane %v707, 1
        %v709 = vadd.f32 %v707, %v708
        %v710 = vrot.slane %v703, 4
        %v711 = vadd.f32 %v703, %v710
        %v712 = vrot.slane %v711, 2
        %v713 = vadd.f32 %v711, %v712
        %v714 = vrot.slane %v713, 1
        %v715 = vadd.f32 %v713, %v714
        %v716 = vsel %vm670, %v709, -1.0
        %v717 = vsel %vm671, %v715, -1.0
        %v718 = vsel %vm670, %v663, -1.0
        %v719 = vsel %vm671, %v669, -1.0
        %v720 = vadd.s32 %v542, %v690
        %v721 = vadd.s32 %v542, %v699
        %v722 = vsel %vm670, %v720, 4294967295
        %v723 = vsel %vm671, %v721, 4294967295
        %v724 = vmul.f32 %v716, 16.0
        %v725 = vmul.f32 %v717, 16.0
        %v726 = vmax.f32 %v724, 0.0
        %v727 = vmax.f32 %v725, 0.0
        %v728 = vsub.f32 0.0, %v726
        %v729 = vsub.f32 0.0, %v727
        %v730 = vmul.f32 %v728, 1.442695
        %v731 = vpow.pop %v730
        %v732 = vmul.f32 %v729, 1.442695
        %v733 = vpow.pop %v732
        %v734 = vmax.f32 %v731, 0.0
        %v735 = vmax.f32 %v733, 0.0
        %v736 = vmin.f32 %v734, 0.99
        %v737 = vmin.f32 %v735, 0.99
        %v738 = vsel %vm670, %v736, 0.0
        %v739 = vsel %vm671, %v737, 0.0
        %v740 = vmul.f32 %v563, %v738
        %v741 = vmul.f32 %v564, %v739
        %v742 = vsub.f32 1.0, %v738
        %v743 = vsub.f32 1.0, %v739
        %v744 = vmul.f32 %v563, %v742
        %v745 = vmul.f32 %v564, %v743
        %v746 = vsel %vm700, 1, 0
        %v747 = vsel %vm701, 1, 0
        %v748 = vcvt.s32.f32 %v746
        %v749 = vcvt.s32.f32 %v747
        %v750 = vmul.f32 %v740, %v748
        %v751 = vmul.f32 %v741, %v749
        %v752 = vadd.f32 %v571, %v750
        %v753 = vadd.f32 %v572, %v751
        %v754 = vadd.f32 %v573, %v738
        %v755 = vadd.f32 %v574, %v739
        %v756 = vmul.f32 %v718, %v738
        %v757 = vmul.f32 %v719, %v739
        %v758 = vadd.f32 %v577, %v756
        %v759 = vadd.f32 %v578, %v757
        %v760 = vcombine.low %v722, %v723
        %v762 = vunpack.c.l.s4 1966171168
        %v763 = vunpack.c.0.s8 %v762
        %v764 = vlaneseq
        %v765 = vshrl.u32 %v764, 7
        %v766 = vsub.s32 %v763, %v765
        %v767 = vrot.slane %v760, %v766
        %v769 = vunpack.c.l.s4 1966171168
        %v770 = vunpack.c.0.s8 %v769
        %v771 = vlaneseq
        %v772 = vshrl.u32 %v771, 7
        %v773 = vsub.s32 %v770, %v772
        %v774 = vrot.slane %v767, %v773
        %s775 = scalar_lea.vmem %s359, 1 [#allocation2]
        %776 = vst.msk [vmem:[%s775] ss:$4 sm:$0x3] %vm597, %v774
        %v779 = vcombine.low %v718, %v719
        %v781 = vunpack.c.l.s4 1966171168
        %v782 = vunpack.c.0.s8 %v781
        %v783 = vlaneseq
        %v784 = vshrl.u32 %v783, 7
        %v785 = vsub.s32 %v782, %v784
        %v786 = vrot.slane %v779, %v785
        %v788 = vunpack.c.l.s4 1966171168
        %v789 = vunpack.c.0.s8 %v788
        %v790 = vlaneseq
        %v791 = vshrl.u32 %v790, 7
        %v792 = vsub.s32 %v789, %v791
        %v793 = vrot.slane %v786, %v792
        %s795 = scalar_lea.vmem %s366, 1 [#allocation4]
        %796 = vst.msk [vmem:[%s795] ss:$4 sm:$0x3] %vm597, %v793
        %v799 = vcombine.low %v716, %v717
        %v801 = vunpack.c.l.s4 1966171168
        %v802 = vunpack.c.0.s8 %v801
        %v803 = vlaneseq
        %v804 = vshrl.u32 %v803, 7
        %v805 = vsub.s32 %v802, %v804
        %v806 = vrot.slane %v799, %v805
        %v808 = vunpack.c.l.s4 1966171168
        %v809 = vunpack.c.0.s8 %v808
        %v810 = vlaneseq
        %v811 = vshrl.u32 %v810, 7
        %v812 = vsub.s32 %v809, %v811
        %v813 = vrot.slane %v806, %v812
        %s815 = scalar_lea.vmem %s373, 1 [#allocation6]
        %816 = vst.msk [vmem:[%s815] ss:$4 sm:$0x3] %vm597, %v813
        %v819 = vcombine.low %v736, %v737
        %v821 = vunpack.c.l.s4 1966171168
        %v822 = vunpack.c.0.s8 %v821
        %v823 = vlaneseq
        %v824 = vshrl.u32 %v823, 7
        %v825 = vsub.s32 %v822, %v824
        %v826 = vrot.slane %v819, %v825
        %v828 = vunpack.c.l.s4 1966171168
        %v829 = vunpack.c.0.s8 %v828
        %v830 = vlaneseq
        %v831 = vshrl.u32 %v830, 7
        %v832 = vsub.s32 %v829, %v831
        %v833 = vrot.slane %v826, %v832
        %s835 = scalar_lea.vmem %s380, 1 [#allocation7]
        %836 = vst.msk [vmem:[%s835] ss:$4 sm:$0x3] %vm597, %v833
        %v837 = vsel %vm700, inf, %v656
        %v838 = vsel %vm701, inf, %v657
        %v839 = vrot.slane %v837, 4
        %v840 = vmin.f32 %v837, %v839
        %v841 = vrot.slane %v840, 2
        %v842 = vmin.f32 %v840, %v841
        %v843 = vrot.slane %v842, 1
        %v844 = vmin.f32 %v842, %v843
        %v845 = vrot.slane %v838, 4
        %v846 = vmin.f32 %v838, %v845
        %v847 = vrot.slane %v846, 2
        %v848 = vmin.f32 %v846, %v847
        %v849 = vrot.slane %v848, 1
        %v850 = vmin.f32 %v848, %v849
        %vm851 = vcmp.lt.f32.partialorder %v844, inf
        %vm852 = vcmp.lt.f32.partialorder %v850, inf
        %vm853 = vcmp.eq.f32.partialorder %v837, %v844
        %vm854 = vcmp.eq.f32.partialorder %v838, %v850
        %v855 = vsel %vm851, 1, 0
        %v856 = vsel %vm852, 1, 0
        %vm857 = vcmp.eq.s32.totalorder %v855, 1
        %vm858 = vcmp.eq.s32.totalorder %v856, 1
        %vm859 = vmand %vm853, %vm857
        %vm860 = vmand %vm854, %vm858
        %v861 = vsel %vm859, %v478, 8
        %v862 = vsel %vm860, %v478, 8
        %v863 = vrot.slane %v861, 4
        %vm864 = vcmp.lt.s32.totalorder %v861, %v863
        %v865 = vsel %vm864, %v861, %v863
        %v866 = vrot.slane %v865, 2
        %vm867 = vcmp.lt.s32.totalorder %v865, %v866
        %v868 = vsel %vm867, %v865, %v866
        %v869 = vrot.slane %v868, 1
        %vm870 = vcmp.lt.s32.totalorder %v868, %v869
        %v871 = vsel %vm870, %v868, %v869
        %v872 = vrot.slane %v862, 4
        %vm873 = vcmp.lt.s32.totalorder %v862, %v872
        %v874 = vsel %vm873, %v862, %v872
        %v875 = vrot.slane %v874, 2
        %vm876 = vcmp.lt.s32.totalorder %v874, %v875
        %v877 = vsel %vm876, %v874, %v875
        %v878 = vrot.slane %v877, 1
        %vm879 = vcmp.lt.s32.totalorder %v877, %v878
        %v880 = vsel %vm879, %v877, %v878
        %vm881 = vcmp.eq.s32.totalorder %v478, %v871
        %vm882 = vcmp.eq.s32.totalorder %v478, %v880
        %v883 = vsel %vm881, %v459, 0.0
        %v884 = vsel %vm882, %v460, 0.0
        %v885 = vrot.slane %v883, 4
        %v886 = vadd.f32 %v883, %v885
        %v887 = vrot.slane %v886, 2
        %v888 = vadd.f32 %v886, %v887
        %v889 = vrot.slane %v888, 1
        %v890 = vadd.f32 %v888, %v889
        %v891 = vrot.slane %v884, 4
        %v892 = vadd.f32 %v884, %v891
        %v893 = vrot.slane %v892, 2
        %v894 = vadd.f32 %v892, %v893
        %v895 = vrot.slane %v894, 1
        %v896 = vadd.f32 %v894, %v895
        %v897 = vsel %vm851, %v890, -1.0
        %v898 = vsel %vm852, %v896, -1.0
        %v899 = vsel %vm851, %v844, -1.0
        %v900 = vsel %vm852, %v850, -1.0
        %v901 = vadd.s32 %v542, %v871
        %v902 = vadd.s32 %v542, %v880
        %v903 = vsel %vm851, %v901, 4294967295
        %v904 = vsel %vm852, %v902, 4294967295
        %v905 = vmul.f32 %v897, 16.0
        %v906 = vmul.f32 %v898, 16.0
        %v907 = vmax.f32 %v905, 0.0
        %v908 = vmax.f32 %v906, 0.0
        %v909 = vsub.f32 0.0, %v907
        %v910 = vsub.f32 0.0, %v908
        %v911 = vmul.f32 %v909, 1.442695
        %v912 = vpow.pop %v911
        %v913 = vmul.f32 %v910, 1.442695
        %v914 = vpow.pop %v913
        %v915 = vmax.f32 %v912, 0.0
        %v916 = vmax.f32 %v914, 0.0
        %v917 = vmin.f32 %v915, 0.99
        %v918 = vmin.f32 %v916, 0.99
        %v919 = vsel %vm851, %v917, 0.0
        %v920 = vsel %vm852, %v918, 0.0
        %v921 = vmul.f32 %v744, %v919
        %v922 = vmul.f32 %v745, %v920
        %v923 = vsub.f32 1.0, %v919
        %v924 = vsub.f32 1.0, %v920
        %v925 = vmul.f32 %v744, %v923
        %v926 = vmul.f32 %v745, %v924
        %v927 = vsel %vm881, 1, 0
        %v928 = vsel %vm882, 1, 0
        %v929 = vcvt.s32.f32 %v927
        %v930 = vcvt.s32.f32 %v928
        %v931 = vmul.f32 %v921, %v929
        %v932 = vmul.f32 %v922, %v930
        %v933 = vadd.f32 %v752, %v931
        %v934 = vadd.f32 %v753, %v932
        %v935 = vadd.f32 %v754, %v919
        %v936 = vadd.f32 %v755, %v920
        %v937 = vmul.f32 %v899, %v919
        %v938 = vmul.f32 %v900, %v920
        %v939 = vadd.f32 %v758, %v937
        %v940 = vadd.f32 %v759, %v938
        %v941 = vcombine.low %v903, %v904
        %v943 = vunpack.c.l.s4 1966171168
        %v944 = vunpack.c.0.s8 %v943
        %v945 = vlaneseq
        %v946 = vshrl.u32 %v945, 7
        %v947 = vsub.s32 %v944, %v946
        %v948 = vrot.slane %v941, %v947
        %v950 = vunpack.c.l.s4 1966171168
        %v951 = vunpack.c.0.s8 %v950
        %v952 = vlaneseq
        %v953 = vshrl.u32 %v952, 7
        %v954 = vsub.s32 %v951, %v953
        %v955 = vrot.slane %v948, %v954
        %s956 = scalar_lea.vmem %s359, 2 [#allocation2]
        %957 = vst.msk [vmem:[%s956] ss:$4 sm:$0x3] %vm597, %v955
        %v960 = vcombine.low %v899, %v900
        %v962 = vunpack.c.l.s4 1966171168
        %v963 = vunpack.c.0.s8 %v962
        %v964 = vlaneseq
        %v965 = vshrl.u32 %v964, 7
        %v966 = vsub.s32 %v963, %v965
        %v967 = vrot.slane %v960, %v966
        %v969 = vunpack.c.l.s4 1966171168
        %v970 = vunpack.c.0.s8 %v969
        %v971 = vlaneseq
        %v972 = vshrl.u32 %v971, 7
        %v973 = vsub.s32 %v970, %v972
        %v974 = vrot.slane %v967, %v973
        %s976 = scalar_lea.vmem %s366, 2 [#allocation4]
        %977 = vst.msk [vmem:[%s976] ss:$4 sm:$0x3] %vm597, %v974
        %v980 = vcombine.low %v897, %v898
        %v982 = vunpack.c.l.s4 1966171168
        %v983 = vunpack.c.0.s8 %v982
        %v984 = vlaneseq
        %v985 = vshrl.u32 %v984, 7
        %v986 = vsub.s32 %v983, %v985
        %v987 = vrot.slane %v980, %v986
        %v989 = vunpack.c.l.s4 1966171168
        %v990 = vunpack.c.0.s8 %v989
        %v991 = vlaneseq
        %v992 = vshrl.u32 %v991, 7
        %v993 = vsub.s32 %v990, %v992
        %v994 = vrot.slane %v987, %v993
        %s996 = scalar_lea.vmem %s373, 2 [#allocation6]
        %997 = vst.msk [vmem:[%s996] ss:$4 sm:$0x3] %vm597, %v994
        %v1000 = vcombine.low %v917, %v918
        %v1002 = vunpack.c.l.s4 1966171168
        %v1003 = vunpack.c.0.s8 %v1002
        %v1004 = vlaneseq
        %v1005 = vshrl.u32 %v1004, 7
        %v1006 = vsub.s32 %v1003, %v1005
        %v1007 = vrot.slane %v1000, %v1006
        %v1009 = vunpack.c.l.s4 1966171168
        %v1010 = vunpack.c.0.s8 %v1009
        %v1011 = vlaneseq
        %v1012 = vshrl.u32 %v1011, 7
        %v1013 = vsub.s32 %v1010, %v1012
        %v1014 = vrot.slane %v1007, %v1013
        %s1016 = scalar_lea.vmem %s380, 2 [#allocation7]
        %1017 = vst.msk [vmem:[%s1016] ss:$4 sm:$0x3] %vm597, %v1014
        %v1018 = vsel %vm881, inf, %v837
        %v1019 = vsel %vm882, inf, %v838
        %v1020 = vrot.slane %v1018, 4
        %v1021 = vmin.f32 %v1018, %v1020
        %v1022 = vrot.slane %v1021, 2
        %v1023 = vmin.f32 %v1021, %v1022
        %v1024 = vrot.slane %v1023, 1
        %v1025 = vmin.f32 %v1023, %v1024
        %v1026 = vrot.slane %v1019, 4
        %v1027 = vmin.f32 %v1019, %v1026
        %v1028 = vrot.slane %v1027, 2
        %v1029 = vmin.f32 %v1027, %v1028
        %v1030 = vrot.slane %v1029, 1
        %v1031 = vmin.f32 %v1029, %v1030
        %vm1032 = vcmp.lt.f32.partialorder %v1025, inf
        %vm1033 = vcmp.lt.f32.partialorder %v1031, inf
        %vm1034 = vcmp.eq.f32.partialorder %v1018, %v1025
        %vm1035 = vcmp.eq.f32.partialorder %v1019, %v1031
        %v1036 = vsel %vm1032, 1, 0
        %v1037 = vsel %vm1033, 1, 0
        %vm1038 = vcmp.eq.s32.totalorder %v1036, 1
        %vm1039 = vcmp.eq.s32.totalorder %v1037, 1
        %vm1040 = vmand %vm1034, %vm1038
        %vm1041 = vmand %vm1035, %vm1039
        %v1042 = vsel %vm1040, %v478, 8
        %v1043 = vsel %vm1041, %v478, 8
        %v1044 = vrot.slane %v1042, 4
        %vm1045 = vcmp.lt.s32.totalorder %v1042, %v1044
        %v1046 = vsel %vm1045, %v1042, %v1044
        %v1047 = vrot.slane %v1046, 2
        %vm1048 = vcmp.lt.s32.totalorder %v1046, %v1047
        %v1049 = vsel %vm1048, %v1046, %v1047
        %v1050 = vrot.slane %v1049, 1
        %vm1051 = vcmp.lt.s32.totalorder %v1049, %v1050
        %v1052 = vsel %vm1051, %v1049, %v1050
        %v1053 = vrot.slane %v1043, 4
        %vm1054 = vcmp.lt.s32.totalorder %v1043, %v1053
        %v1055 = vsel %vm1054, %v1043, %v1053
        %v1056 = vrot.slane %v1055, 2
        %vm1057 = vcmp.lt.s32.totalorder %v1055, %v1056
        %v1058 = vsel %vm1057, %v1055, %v1056
        %v1059 = vrot.slane %v1058, 1
        %vm1060 = vcmp.lt.s32.totalorder %v1058, %v1059
        %v1061 = vsel %vm1060, %v1058, %v1059
        %vm1062 = vcmp.eq.s32.totalorder %v478, %v1052
        %vm1063 = vcmp.eq.s32.totalorder %v478, %v1061
        %v1064 = vsel %vm1062, %v459, 0.0
        %v1065 = vsel %vm1063, %v460, 0.0
        %v1066 = vrot.slane %v1064, 4
        %v1067 = vadd.f32 %v1064, %v1066
        %v1068 = vrot.slane %v1067, 2
        %v1069 = vadd.f32 %v1067, %v1068
        %v1070 = vrot.slane %v1069, 1
        %v1071 = vadd.f32 %v1069, %v1070
        %v1072 = vrot.slane %v1065, 4
        %v1073 = vadd.f32 %v1065, %v1072
        %v1074 = vrot.slane %v1073, 2
        %v1075 = vadd.f32 %v1073, %v1074
        %v1076 = vrot.slane %v1075, 1
        %v1077 = vadd.f32 %v1075, %v1076
        %v1078 = vsel %vm1032, %v1071, -1.0
        %v1079 = vsel %vm1033, %v1077, -1.0
        %v1080 = vsel %vm1032, %v1025, -1.0
        %v1081 = vsel %vm1033, %v1031, -1.0
        %v1082 = vadd.s32 %v542, %v1052
        %v1083 = vadd.s32 %v542, %v1061
        %v1084 = vsel %vm1032, %v1082, 4294967295
        %v1085 = vsel %vm1033, %v1083, 4294967295
        %v1086 = vmul.f32 %v1078, 16.0
        %v1087 = vmul.f32 %v1079, 16.0
        %v1088 = vmax.f32 %v1086, 0.0
        %v1089 = vmax.f32 %v1087, 0.0
        %v1090 = vsub.f32 0.0, %v1088
        %v1091 = vsub.f32 0.0, %v1089
        %v1092 = vmul.f32 %v1090, 1.442695
        %v1093 = vpow.pop %v1092
        %v1094 = vmul.f32 %v1091, 1.442695
        %v1095 = vpow.pop %v1094
        %v1096 = vmax.f32 %v1093, 0.0
        %v1097 = vmax.f32 %v1095, 0.0
        %v1098 = vmin.f32 %v1096, 0.99
        %v1099 = vmin.f32 %v1097, 0.99
        %v1100 = vsel %vm1032, %v1098, 0.0
        %v1101 = vsel %vm1033, %v1099, 0.0
        %v1102 = vmul.f32 %v925, %v1100
        %v1103 = vmul.f32 %v926, %v1101
        %v1104 = vsel %vm1062, 1, 0
        %v1105 = vsel %vm1063, 1, 0
        %v1106 = vcvt.s32.f32 %v1104
        %v1107 = vcvt.s32.f32 %v1105
        %v1108 = vmul.f32 %v1102, %v1106
        %v1109 = vmul.f32 %v1103, %v1107
        %v1110 = vadd.f32 %v933, %v1108
        %v1111 = vadd.f32 %v934, %v1109
        %v1112 = vadd.f32 %v935, %v1100
        %v1113 = vadd.f32 %v936, %v1101
        %v1114 = vmul.f32 %v1080, %v1100
        %v1115 = vmul.f32 %v1081, %v1101
        %v1116 = vadd.f32 %v939, %v1114
        %v1117 = vadd.f32 %v940, %v1115
        %v1118 = vcombine.low %v1084, %v1085
        %v1120 = vunpack.c.l.s4 1966171168
        %v1121 = vunpack.c.0.s8 %v1120
        %v1122 = vlaneseq
        %v1123 = vshrl.u32 %v1122, 7
        %v1124 = vsub.s32 %v1121, %v1123
        %v1125 = vrot.slane %v1118, %v1124
        %v1127 = vunpack.c.l.s4 1966171168
        %v1128 = vunpack.c.0.s8 %v1127
        %v1129 = vlaneseq
        %v1130 = vshrl.u32 %v1129, 7
        %v1131 = vsub.s32 %v1128, %v1130
        %v1132 = vrot.slane %v1125, %v1131
        %s1133 = scalar_lea.vmem %s359, 3 [#allocation2]
        %1134 = vst.msk [vmem:[%s1133] ss:$4 sm:$0x3] %vm597, %v1132
        %v1137 = vcombine.low %v1080, %v1081
        %v1139 = vunpack.c.l.s4 1966171168
        %v1140 = vunpack.c.0.s8 %v1139
        %v1141 = vlaneseq
        %v1142 = vshrl.u32 %v1141, 7
        %v1143 = vsub.s32 %v1140, %v1142
        %v1144 = vrot.slane %v1137, %v1143
        %v1146 = vunpack.c.l.s4 1966171168
        %v1147 = vunpack.c.0.s8 %v1146
        %v1148 = vlaneseq
        %v1149 = vshrl.u32 %v1148, 7
        %v1150 = vsub.s32 %v1147, %v1149
        %v1151 = vrot.slane %v1144, %v1150
        %s1153 = scalar_lea.vmem %s366, 3 [#allocation4]
        %1154 = vst.msk [vmem:[%s1153] ss:$4 sm:$0x3] %vm597, %v1151
        %v1157 = vcombine.low %v1078, %v1079
        %v1159 = vunpack.c.l.s4 1966171168
        %v1160 = vunpack.c.0.s8 %v1159
        %v1161 = vlaneseq
        %v1162 = vshrl.u32 %v1161, 7
        %v1163 = vsub.s32 %v1160, %v1162
        %v1164 = vrot.slane %v1157, %v1163
        %v1166 = vunpack.c.l.s4 1966171168
        %v1167 = vunpack.c.0.s8 %v1166
        %v1168 = vlaneseq
        %v1169 = vshrl.u32 %v1168, 7
        %v1170 = vsub.s32 %v1167, %v1169
        %v1171 = vrot.slane %v1164, %v1170
        %s1173 = scalar_lea.vmem %s373, 3 [#allocation6]
        %1174 = vst.msk [vmem:[%s1173] ss:$4 sm:$0x3] %vm597, %v1171
        %v1177 = vcombine.low %v1098, %v1099
        %v1179 = vunpack.c.l.s4 1966171168
        %v1180 = vunpack.c.0.s8 %v1179
        %v1181 = vlaneseq
        %v1182 = vshrl.u32 %v1181, 7
        %v1183 = vsub.s32 %v1180, %v1182
        %v1184 = vrot.slane %v1177, %v1183
        %v1186 = vunpack.c.l.s4 1966171168
        %v1187 = vunpack.c.0.s8 %v1186
        %v1188 = vlaneseq
        %v1189 = vshrl.u32 %v1188, 7
        %v1190 = vsub.s32 %v1187, %v1189
        %v1191 = vrot.slane %v1184, %v1190
        %s1193 = scalar_lea.vmem %s380, 3 [#allocation7]
        %1194 = vst.msk [vmem:[%s1193] ss:$4 sm:$0x3] %vm597, %v1191
        %v1195 = vld [vmem:[%s408] sm:$0xf]
        %v1196 = vpack.c.bf16 %v1195, %v1195
        %v1197 = vpack.c.bf16 %v1110, %v1110
        %v1198 = vpack.c.bf16 %v1111, %v1111
        %vm1199 = vcmask 64512
        %v1201 = vsel %vm1199, %v1196, 0
        %vm1203 = vcmask 1043456
        %v1205 = vsel %vm1203, %v1197, 0
        %v1208 = vsel %vm1203, %v1198, 0
        %1210 = vmatprep.subr.bf16.mxu0 %v1208
        %1211 = vmatpush1.bf16.msra.mxu0 %v1205
        %1212 = vmatprep.subr.bf16.mxu0 0
        %1213 = vmatpush1.bf16.msra.mxu0 0
        %1214 = vmatprep.subr.bf16.mxu0 0
        %1215 = vmatpush1.bf16.msra.mxu0 0
        %1216 = vmatprep.subr.bf16.mxu0 0
        %1217 = vmatpush1.bf16.msra.mxu0 0
        %1218 = vmatprep.subr.bf16.mxu0 0
        %1219 = vmatpush1.bf16.msra.mxu0 0
        %1220 = vmatprep.subr.bf16.mxu0 0
        %1221 = vmatpush1.bf16.msra.mxu0 0
        %1222 = vmatprep.subr.bf16.mxu0 0
        %1223 = vmatpush1.bf16.msra.mxu0 0
        %1224 = vmatprep.subr.bf16.mxu0 0
        %1225 = vmatpush1.bf16.msra.mxu0 0
        %1226 = vmatprep.subr.bf16.mxu0 0
        %1227 = vmatpush1.bf16.msra.mxu0 0
        %1228 = vmatprep.subr.bf16.mxu0 0
        %1229 = vmatpush1.bf16.msra.mxu0 0
        %1230 = vmatprep.subr.bf16.mxu0 0
        %1231 = vmatpush1.bf16.msra.mxu0 0
        %1232 = vmatprep.subr.bf16.mxu0 0
        %1233 = vmatpush1.bf16.msra.mxu0 0
        %1234 = vmatprep.subr.bf16.mxu0 0
        %1235 = vmatpush1.bf16.msra.mxu0 0
        %1236 = vmatprep.subr.bf16.mxu0 0
        %1237 = vmatpush1.bf16.msra.mxu0 0
        %1238 = vmatprep.subr.bf16.mxu0 0
        %1239 = vmatpush1.bf16.msra.mxu0 0
        %1240 = vmatprep.subr.bf16.mxu0 0
        %1241 = vmatpush1.bf16.msra.mxu0 0
        %1242 = vmatprep.mubr.bf16.mxu0 0
        %1243 = vmatmul.mubr.bf16.gmra.mrb[0].mxu0 %v1201
        %v1244 = vpop.f32.mrb[0].mxu0
        %v1245 = vadd.f32 0.0, %v1244
        %v1246 = vpop.f32.mrb[0].mxu0
        %v1247 = vadd.f32 0.0, %v1246
        %v1248 = vpop.f32.mrb[0].mxu0
        %v1249 = vpop.f32.mrb[0].mxu0
        %1250 = vdwg.mxu0
        %v1253 = vcombine.low %v1245, %v1247
        %1255 = vst [vmem:[%s387] sm:$0xff] %v1253
        %v1256 = vmax.f32 %v1112, 1e-09
        %v1257 = vmax.f32 %v1113, 1e-09
        %v1258 = vrcp.pop %v1256
        %v1259 = vmul.f32 %v1116, %v1258
        %v1260 = vrcp.pop %v1257
        %v1261 = vmul.f32 %v1117, %v1260
        %v1264 = vcombine.low %v1259, %v1261
        %v1266 = vunpack.c.l.s4 1966171168
        %v1267 = vunpack.c.0.s8 %v1266
        %v1268 = vlaneseq
        %v1269 = vshrl.u32 %v1268, 7
        %v1270 = vsub.s32 %v1267, %v1269
        %v1271 = vrot.slane %v1264, %v1270
        %v1273 = vunpack.c.l.s4 1966171168
        %v1274 = vunpack.c.0.s8 %v1273
        %v1275 = vlaneseq
        %v1276 = vshrl.u32 %v1275, 7
        %v1277 = vsub.s32 %v1274, %v1276
        %v1278 = vrot.slane %v1271, %v1277
        %1280 = vst.msk [vmem:[%s394] sm:$0x3] %vm597, %v1278
        %s1281 = sand.u32 %s132, 1
        %s1282 = scalar_lea.sflag [#allocation3], %s1281
        %s1283 = sand.u32 %s132, 1
        %s1284 = smul.addr %s1283, 8
        %s1285 = scalar_lea.vmem [#allocation2], %s1284
        %s1286 = sand.u32 %s32, 1
        %s1287 = scalar_lea.sflag [#allocation5], %s1286
        %s1288 = sand.u32 %s160, 1
        %s1289 = smul.addr %s1288, 8
        %s1290 = scalar_lea.vmem [#allocation4], %s1289
        %s1291 = sand.u32 %s32, 1
        %s1292 = scalar_lea.sflag [#allocation5], %s1291
        %s1293 = sand.u32 %s188, 1
        %s1294 = smul.addr %s1293, 8
        %s1295 = scalar_lea.vmem [#allocation6], %s1294
        %s1296 = sand.u32 %s32, 1
        %s1297 = scalar_lea.sflag [#allocation8], %s1296
        %s1298 = sand.u32 %s216, 1
        %s1299 = smul.addr %s1298, 8
        %s1300 = scalar_lea.vmem [#allocation7], %s1299
        %s1301 = sand.u32 %s32, 1
        %s1302 = scalar_lea.sflag [#allocation8], %s1301
        %s1303 = sand.u32 %s244, 1
        %s1304 = smul.addr %s1303, 8
        %s1305 = scalar_lea.vmem [#allocation9], %s1304
        %s1306 = sand.u32 %s272, 1
        %s1307 = scalar_lea.sflag [#allocation11], %s1306
        %s1308 = sand.u32 %s272, 1
        %s1309 = smul.addr %s1308, 2
        %s1310 = scalar_lea.vmem [#allocation10], %s1309
        // Predicated region
        $region33: #{tpu_custom_call.1} parent=31 // pred_check
          %p1311 = pneg %p142
        $region34: #{tpu_custom_call.1} parent=31 // pred_check_branch
          %1313 = sbr.rel (%p1311) target = $region36
        $region35: #{tpu_custom_call.1} parent=31 // pred_region
          %s1314 = smul.u32 2, %s37
          %s1316 = ssub.s32 128, 128
          %1317 = vsyncadd %s1282, %s1316
          %s1318 = smul.addr %s36, 2
          %s1319 = sadd.s32 %s1314, %s1318
          %s1320 = smul.addr %s1319, 64
          %s1321 = scalar_lea.hbm %s3, %s1320
          %s1323 = sshll.u32 %s1285, 4
          %s1324 = int_to_ptr.vmem [resolvable:$true] %s1323
          %1326 = dma.vmem_to_hbm [thread:$0]  %s1324, 128, %s1321, %s1282
        $region36: #{tpu_custom_call.1} parent=31 // pred_fallthru
          _
        // Predicated region
        $region37: #{tpu_custom_call.1} parent=31 // pred_check
          %p1327 = pneg %p170
        $region38: #{tpu_custom_call.1} parent=31 // pred_check_branch
          %1329 = sbr.rel (%p1327) target = $region40
        $region39: #{tpu_custom_call.1} parent=31 // pred_region
          %s1330 = smul.u32 2, %s37
          %s1332 = ssub.s32 128, 128
          %1333 = vsyncadd %s1287, %s1332
          %s1334 = smul.addr %s36, 2
          %s1335 = sadd.s32 %s1330, %s1334
          %s1336 = smul.addr %s1335, 64
          %s1337 = scalar_lea.hbm %s4, %s1336
          %s1339 = sshll.u32 %s1290, 4
          %s1340 = int_to_ptr.vmem [resolvable:$true] %s1339
          %1342 = dma.vmem_to_hbm [thread:$0]  %s1340, 128, %s1337, %s1287
        $region40: #{tpu_custom_call.1} parent=31 // pred_fallthru
          _
        // Predicated region
        $region41: #{tpu_custom_call.1} parent=31 // pred_check
          %p1343 = pneg %p198
        $region42: #{tpu_custom_call.1} parent=31 // pred_check_branch
          %1345 = sbr.rel (%p1343) target = $region44
        $region43: #{tpu_custom_call.1} parent=31 // pred_region
          %s1346 = smul.u32 2, %s37
          %s1348 = ssub.s32 128, 128
          %1349 = vsyncadd %s1292, %s1348
          %s1350 = smul.addr %s36, 2
          %s1351 = sadd.s32 %s1346, %s1350
          %s1352 = smul.addr %s1351, 64
          %s1353 = scalar_lea.hbm %s5, %s1352
          %s1355 = sshll.u32 %s1295, 4
          %s1356 = int_to_ptr.vmem [resolvable:$true] %s1355
          %1358 = dma.vmem_to_hbm [thread:$0]  %s1356, 128, %s1353, %s1292
        $region44: #{tpu_custom_call.1} parent=31 // pred_fallthru
          _
        // Predicated region
        $region45: #{tpu_custom_call.1} parent=31 // pred_check
          %p1359 = pneg %p226
        $region46: #{tpu_custom_call.1} parent=31 // pred_check_branch
          %1361 = sbr.rel (%p1359) target = $region48
        $region47: #{tpu_custom_call.1} parent=31 // pred_region
          %s1362 = smul.u32 2, %s37
          %s1364 = ssub.s32 128, 128
          %1365 = vsyncadd %s1297, %s1364
          %s1366 = smul.addr %s36, 2
          %s1367 = sadd.s32 %s1362, %s1366
          %s1368 = smul.addr %s1367, 64
          %s1369 = scalar_lea.hbm %s6, %s1368
          %s1371 = sshll.u32 %s1300, 4
          %s1372 = int_to_ptr.vmem [resolvable:$true] %s1371
          %1374 = dma.vmem_to_hbm [thread:$0]  %s1372, 128, %s1369, %s1297
        $region48: #{tpu_custom_call.1} parent=31 // pred_fallthru
          _
        // Predicated region
        $region49: #{tpu_custom_call.1} parent=31 // pred_check
          %p1375 = pneg %p254
        $region50: #{tpu_custom_call.1} parent=31 // pred_check_branch
          %1377 = sbr.rel (%p1375) target = $region52
        $region51: #{tpu_custom_call.1} parent=31 // pred_region
          %s1378 = smul.u32 2, %s37
          %s1380 = ssub.s32 128, 128
          %1381 = vsyncadd %s1302, %s1380
          %s1382 = smul.addr %s36, 2
          %s1383 = sadd.s32 %s1378, %s1382
          %s1384 = smul.addr %s1383, 64
          %s1385 = scalar_lea.hbm %s7, %s1384
          %s1387 = sshll.u32 %s1305, 4
          %s1388 = int_to_ptr.vmem [resolvable:$true] %s1387
          %1390 = dma.vmem_to_hbm [thread:$0]  %s1388, 128, %s1385, %s1302
        $region52: #{tpu_custom_call.1} parent=31 // pred_fallthru
          _
        // Predicated region
        $region53: #{tpu_custom_call.1} parent=31 // pred_check
          %p1391 = pneg %p282
        $region54: #{tpu_custom_call.1} parent=31 // pred_check_branch
          %1393 = sbr.rel (%p1391) target = $region56
        $region55: #{tpu_custom_call.1} parent=31 // pred_region
          %s1394 = smul.u32 2, %s37
          %s1396 = ssub.s32 32, 32
          %1397 = vsyncadd %s1307, %s1396
          %s1398 = smul.addr %s36, 2
          %s1399 = sadd.s32 %s1394, %s1398
          %s1400 = smul.addr %s1399, 16
          %s1401 = scalar_lea.hbm %s8, %s1400
          %s1403 = sshll.u32 %s1310, 4
          %s1404 = int_to_ptr.vmem [resolvable:$true] %s1403
          %1406 = dma.vmem_to_hbm [thread:$0]  %s1404, 32, %s1401, %s1307
        $region56: #{tpu_custom_call.1} parent=31 // pred_fallthru
          _
      $region32: #{tpu_custom_call.1} parent=5 // pred_fallthru
        _
      %p1407 = scmp.le.s32.totalorder 2, %s27
      // Predicated region
      $region57: #{tpu_custom_call.1} parent=5 // pred_check
        %p1408 = pneg %p1407
      $region58: #{tpu_custom_call.1} parent=5 // pred_check_branch
        %1410 = sbr.rel (%p1408) target = $region60
      $region59: #{tpu_custom_call.1} parent=5 // pred_region
        %s1411 = ssub.s32 %s27, 2
        // Predicated region
        $region61: #{tpu_custom_call.1} parent=59 // pred_check
          %p1412 = pneg %p148
        $region62: #{tpu_custom_call.1} parent=59 // pred_check_branch
          %1414 = sbr.rel (%p1412) target = $region64
        $region63: #{tpu_custom_call.1} parent=59 // pred_region
          %s1415 = sand.u32 %s133, 1
          %s1416 = scalar_lea.sflag [#allocation3], %s1415
          %s1417 = sand.u32 %s133, 1
          %s1418 = smul.addr %s1417, 8
          %s1419 = scalar_lea.vmem [#allocation2], %s1418
          %1420 = dma.done %s1416, 128
        $region64: #{tpu_custom_call.1} parent=59 // pred_fallthru
          _
        // Predicated region
        $region65: #{tpu_custom_call.1} parent=59 // pred_check
          %p1421 = pneg %p176
        $region66: #{tpu_custom_call.1} parent=59 // pred_check_branch
          %1423 = sbr.rel (%p1421) target = $region68
        $region67: #{tpu_custom_call.1} parent=59 // pred_region
          %s1424 = sand.u32 %s33, 1
          %s1425 = scalar_lea.sflag [#allocation5], %s1424
          %s1426 = sand.u32 %s161, 1
          %s1427 = smul.addr %s1426, 8
          %s1428 = scalar_lea.vmem [#allocation4], %s1427
          %1429 = dma.done %s1425, 128
        $region68: #{tpu_custom_call.1} parent=59 // pred_fallthru
          _
        // Predicated region
        $region69: #{tpu_custom_call.1} parent=59 // pred_check
          %p1430 = pneg %p204
        $region70: #{tpu_custom_call.1} parent=59 // pred_check_branch
          %1432 = sbr.rel (%p1430) target = $region72
        $region71: #{tpu_custom_call.1} parent=59 // pred_region
          %s1433 = sand.u32 %s33, 1
          %s1434 = scalar_lea.sflag [#allocation5], %s1433
          %s1435 = sand.u32 %s189, 1
          %s1436 = smul.addr %s1435, 8
          %s1437 = scalar_lea.vmem [#allocation6], %s1436
          %1438 = dma.done %s1434, 128
        $region72: #{tpu_custom_call.1} parent=59 // pred_fallthru
          _
        // Predicated region
        $region73: #{tpu_custom_call.1} parent=59 // pred_check
          %p1439 = pneg %p232
        $region74: #{tpu_custom_call.1} parent=59 // pred_check_branch
          %1441 = sbr.rel (%p1439) target = $region76
        $region75: #{tpu_custom_call.1} parent=59 // pred_region
          %s1442 = sand.u32 %s33, 1
          %s1443 = scalar_lea.sflag [#allocation8], %s1442
          %s1444 = sand.u32 %s217, 1
          %s1445 = smul.addr %s1444, 8
          %s1446 = scalar_lea.vmem [#allocation7], %s1445
          %1447 = dma.done %s1443, 128
        $region76: #{tpu_custom_call.1} parent=59 // pred_fallthru
          _
        // Predicated region
        $region77: #{tpu_custom_call.1} parent=59 // pred_check
          %p1448 = pneg %p260
        $region78: #{tpu_custom_call.1} parent=59 // pred_check_branch
          %1450 = sbr.rel (%p1448) target = $region80
        $region79: #{tpu_custom_call.1} parent=59 // pred_region
          %s1451 = sand.u32 %s33, 1
          %s1452 = scalar_lea.sflag [#allocation8], %s1451
          %s1453 = sand.u32 %s245, 1
          %s1454 = smul.addr %s1453, 8
          %s1455 = scalar_lea.vmem [#allocation9], %s1454
          %1456 = dma.done %s1452, 128
        $region80: #{tpu_custom_call.1} parent=59 // pred_fallthru
          _
        // Predicated region
        $region81: #{tpu_custom_call.1} parent=59 // pred_check
          %p1457 = pneg %p288
        $region82: #{tpu_custom_call.1} parent=59 // pred_check_branch
          %1459 = sbr.rel (%p1457) target = $region84
        $region83: #{tpu_custom_call.1} parent=59 // pred_region
          %s1460 = sand.u32 %s273, 1
          %s1461 = scalar_lea.sflag [#allocation11], %s1460
          %s1462 = sand.u32 %s273, 1
          %s1463 = smul.addr %s1462, 2
          %s1464 = scalar_lea.vmem [#allocation10], %s1463
          %1465 = dma.done %s1461, 32
        $region84: #{tpu_custom_call.1} parent=59 // pred_fallthru
          _
      $region60: #{tpu_custom_call.1} parent=5 // pred_fallthru
        _
    $region6: #{tpu_custom_call.1} parent=1 // loop_footer
      %s31 = sadd.s32 1, %s27
    $region7: #{tpu_custom_call.1} parent=1 // loop_footer_branch
      %26 = sbr.rel target = $region3
    $region8: #{tpu_custom_call.1} parent=1 // loop_exit
      _
    %1466 = vsyncpa [#allocation3], 1
    %s1467 = scalar_lea.sflag [#allocation3], 1
    %1468 = vsyncpa %s1467, 1
    %1469 = vsyncpa [#allocation5], 1
    %s1470 = scalar_lea.sflag [#allocation5], 1
    %1471 = vsyncpa %s1470, 1
    %1472 = vsyncpa [#allocation8], 1
    %s1473 = scalar_lea.sflag [#allocation8], 1
    %1474 = vsyncpa %s1473, 1
    %1475 = vsyncpa [#allocation11], 1
    %s1476 = scalar_lea.sflag [#allocation11], 1
    %1477 = vsyncpa %s1476, 1

</llo_original>
